<compile_context>
chip_gen: v5e
topology: v5e:2x2
jax: 0.10.0
libtpu: 0.0.40
codegen_flags: <defaults>
</compile_context>

<pallas_src>
import functools

import jax
import jax.numpy as jnp
from jax.experimental import pallas as pl
from jax.experimental.pallas import tpu as pltpu


def _final_patch_expand_kernel(x_ref, w_ref, gm_ref, gt_ref, gtg_ref, beta_ref,
                               o_ref, *, patch: int, eps: float):
    # x_ref   : (TH, W, dim)            input rows (B,H folded)
    # w_ref   : (P, dim, P*dim)         expand weight, split by p1
    # gm_ref  : (P*dim, P)              group-mean matrix (one-hot / dim)
    # gt_ref  : (P, P*dim)              group broadcast (one-hot)
    # gtg_ref : (P, P*dim)              group broadcast * gamma
    # beta_ref: (1, P*dim)              beta tiled over p2
    # o_ref   : (TH, P, W, P*dim)       output rows (p1 = second axis)
    th, w_pix, dim = x_ref.shape
    pdim = w_ref.shape[2]

    x = x_ref[...].reshape(th * w_pix, dim)            # (M, dim), M = TH*W
    gm = gm_ref[...]
    gt = gt_ref[...]
    gtg = gtg_ref[...]
    beta = beta_ref[...]

    for p1 in range(patch):                            # static unroll (P=4)
        # Expand for this p1: (M, dim) @ (dim, P*dim) on the MXU, f32 acc.
        y = jnp.dot(x, w_ref[p1], preferred_element_type=jnp.float32)

        # Grouped LayerNorm over each dim-sized lane group (group index = p2).
        mean_g = jnp.dot(y, gm, preferred_element_type=jnp.float32)       # (M, P)
        d = y - jnp.dot(mean_g, gt, preferred_element_type=jnp.float32)   # centered
        var_g = jnp.dot(d * d, gm, preferred_element_type=jnp.float32)    # biased var
        rstd_g = jax.lax.rsqrt(var_g + eps)                               # EUP
        out = d * jnp.dot(rstd_g, gtg, preferred_element_type=jnp.float32) + beta

        # Lane-dense store: tile last dim is P*dim (>=128 for dim>=32).
        o_ref[:, p1] = out.reshape(th, w_pix, pdim).astype(o_ref.dtype)


def final_patch_expand_x4(x, w_expand, gamma, beta, *, patch_size=4, eps=1e-5,
                          compute_dtype=None, row_tile=None):
    """x: (B, H, W, dim). w_expand: (patch^2*dim, dim) PyTorch Linear weight.
    gamma/beta: (dim,) LayerNorm params.  Returns (B, P*H, P*W, dim)."""
    B, H, W, dim = x.shape
    P = patch_size
    assert w_expand.shape == (P * P * dim, dim), w_expand.shape
    NR = B * H
    cd = jnp.dtype(compute_dtype) if compute_dtype is not None else x.dtype

    # y = x @ W.T ; split the output columns by p1 -> (P, dim, P*dim).
    # Column index of W.T is o = p1*(P*dim) + p2*dim + c (matches the rearrange).
    wt = jnp.asarray(w_expand).T.reshape(dim, P, P * dim)
    wt = jnp.transpose(wt, (1, 0, 2)).astype(cd)

    # One-hot group matrices for the per-group (p2) LayerNorm statistics.
    groups = jnp.arange(P * dim, dtype=jnp.int32) // dim
    onehot = (groups[:, None] == jnp.arange(P, dtype=jnp.int32)[None, :])
    onehot = onehot.astype(jnp.float32)                      # (P*dim, P)
    gm = onehot / jnp.float32(dim)                           # mean:   y @ gm
    gt = onehot.T                                            # bcast:  stats @ gt
    gtg = gt * jnp.tile(jnp.asarray(gamma, jnp.float32), P)[None, :]
    beta_t = jnp.tile(jnp.asarray(beta, jnp.float32), P).reshape(1, P * dim)

    # Fold B and H into one row axis (free reshape) and cast to compute dtype.
    x2 = jnp.asarray(x).astype(cd).reshape(NR, W, dim)

    # Row tile: target ~2 MiB output blocks (~4 MiB double-buffered) so the
    # pipeline stays well under default scoped-VMEM limits on v5e/v6e/v7x
    # while keeping per-step overhead (~0.35 us) negligible.
    if row_tile is None:
        per_row_out = P * P * dim * W * 4                    # bytes per folded row
        row_tile = max(1, (2 << 20) // per_row_out)
    row_tile = max(1, min(int(row_tile), NR))
    while NR % row_tile:
        row_tile -= 1
    TH = row_tile

    kernel = functools.partial(_final_patch_expand_kernel, patch=P, eps=eps)

    out = pl.pallas_call(
        kernel,
        out_shape=jax.ShapeDtypeStruct((NR, P, W, P * dim), x.dtype),
        grid=(NR // TH,),
        in_specs=[
            pl.BlockSpec((TH, W, dim), lambda i: (i, 0, 0)),
            pl.BlockSpec((P, dim, P * dim), lambda i: (0, 0, 0)),
            pl.BlockSpec((P * dim, P), lambda i: (0, 0)),
            pl.BlockSpec((P, P * dim), lambda i: (0, 0)),
            pl.BlockSpec((P, P * dim), lambda i: (0, 0)),
            pl.BlockSpec((1, P * dim), lambda i: (0, 0)),
        ],
        out_specs=pl.BlockSpec((TH, P, W, P * dim), lambda i: (i, 0, 0, 0)),
        compiler_params=pltpu.CompilerParams(
            dimension_semantics=("parallel",)),
    )(x2, wt, gm, gt, gtg, beta_t)

    # (NR, P, W, P*dim) row-major == (B, P*H, P*W, dim) row-major: free reshape.
    return out.reshape(B, P * H, P * W, dim)


def _reference(x, w_expand, gamma, beta, patch=4, eps=1e-5):
    """Pure-JAX reference with the PyTorch module's math."""
    B, H, W, dim = x.shape
    y = jnp.einsum("bhwd,od->bhwo", x, w_expand)              # Linear, no bias
    y = y.reshape(B, H, W, patch, patch, dim)
    y = jnp.transpose(y, (0, 1, 3, 2, 4, 5))                  # b h p1 w p2 c
    y = y.reshape(B, H * patch, W * patch, dim)
    mean = jnp.mean(y, axis=-1, keepdims=True)
    var = jnp.mean((y - mean) ** 2, axis=-1, keepdims=True)
    return (y - mean) * jax.lax.rsqrt(var + eps) * gamma + beta


if __name__ == "__main__":
    key = jax.random.PRNGKey(0)
    B, H, W, dim, P = 2, 8, 8, 32, 4                          # x: (2, 8, 8, 32)

    kx, kw, kg, kb = jax.random.split(key, 4)
    x = jax.random.normal(kx, (B, H, W, dim), jnp.float32)
    # nn.Linear(dim, 16*dim, bias=False) weight, deterministic init.
    w_expand = (jax.random.normal(kw, (P * P * dim, dim), jnp.float32)
                / jnp.sqrt(jnp.float32(dim)))
    gamma = 1.0 + 0.1 * jax.random.normal(kg, (dim,), jnp.float32)
    beta = 0.1 * jax.random.normal(kb, (dim,), jnp.float32)

    # f32 path (row_tile=4 -> 4 grid steps, exercises the pipeline).
    out = final_patch_expand_x4(x, w_expand, gamma, beta, patch_size=P,
                                row_tile=4)
    out = jax.block_until_ready(out)
    assert out.shape == (B, P * H, P * W, dim), out.shape

    ref = _reference(x, w_expand, gamma, beta, patch=P)
    assert jnp.allclose(out, ref, atol=2e-4, rtol=2e-4), \
        float(jnp.max(jnp.abs(out - ref)))

    # bf16 compute path (halves HBM read bytes of the matmul inputs);
    # LayerNorm / accumulation stay f32.  Loose tolerance for bf16 inputs.
    out_bf16 = final_patch_expand_x4(x, w_expand, gamma, beta, patch_size=P,
                                     compute_dtype=jnp.bfloat16, row_tile=4)
    out_bf16 = jax.block_until_ready(out_bf16)
    assert float(jnp.max(jnp.abs(out_bf16 - ref))) < 0.25

    print("KERNEL_OK")
</pallas_src>

<mosaic_0001>
module attributes {stable_mosaic.version = 11 : i64} {
  func.func @_final_patch_expand_kernel(%arg0: i32, %arg1: memref<4x8x32xf32, #tpu.memory_space<vmem>>, %arg2: memref<4x32x128xf32, #tpu.memory_space<vmem>>, %arg3: memref<128x4xf32, #tpu.memory_space<vmem>>, %arg4: memref<4x128xf32, #tpu.memory_space<vmem>>, %arg5: memref<4x128xf32, #tpu.memory_space<vmem>>, %arg6: memref<1x128xf32, #tpu.memory_space<vmem>>, %arg7: memref<4x4x8x128xf32, #tpu.memory_space<vmem>>) attributes {dimension_semantics = [#tpu.dimension_semantics<parallel>], iteration_bounds = array<i64: 4>, scalar_prefetch = 0 : i64, scratch_operands = 0 : i64, tpu.core_type = #tpu.core_type<tc>, window_params = [{transform_indices = @transform_0, window_bounds = array<i64: 4, 8, 32>}, {pipeline_mode = #tpu.pipeline_mode<synchronous>, transform_indices = @transform_1, window_bounds = array<i64: 4, 32, 128>}, {pipeline_mode = #tpu.pipeline_mode<synchronous>, transform_indices = @transform_2, window_bounds = array<i64: 128, 4>}, {pipeline_mode = #tpu.pipeline_mode<synchronous>, transform_indices = @transform_3, window_bounds = array<i64: 4, 128>}, {pipeline_mode = #tpu.pipeline_mode<synchronous>, transform_indices = @transform_4, window_bounds = array<i64: 4, 128>}, {pipeline_mode = #tpu.pipeline_mode<synchronous>, transform_indices = @transform_5, window_bounds = array<i64: 1, 128>}, {transform_indices = @transform_6, window_bounds = array<i64: 4, 4, 8, 128>}]} {
    %c0 = arith.constant 0 : index
    %c0_0 = arith.constant 0 : index
    %c0_1 = arith.constant 0 : index
    %0 = vector.load %arg1[%c0, %c0_0, %c0_1] : memref<4x8x32xf32, #tpu.memory_space<vmem>>, vector<4x8x32xf32>
    %1 = vector.shape_cast %0 : vector<4x8x32xf32> to vector<32x32xf32>
    %c0_2 = arith.constant 0 : index
    %c0_3 = arith.constant 0 : index
    %2 = vector.load %arg3[%c0_2, %c0_3] : memref<128x4xf32, #tpu.memory_space<vmem>>, vector<128x4xf32>
    %c0_4 = arith.constant 0 : index
    %c0_5 = arith.constant 0 : index
    %3 = vector.load %arg4[%c0_4, %c0_5] : memref<4x128xf32, #tpu.memory_space<vmem>>, vector<4x128xf32>
    %c0_6 = arith.constant 0 : index
    %c0_7 = arith.constant 0 : index
    %4 = vector.load %arg5[%c0_6, %c0_7] : memref<4x128xf32, #tpu.memory_space<vmem>>, vector<4x128xf32>
    %c0_8 = arith.constant 0 : index
    %c0_9 = arith.constant 0 : index
    %5 = vector.load %arg6[%c0_8, %c0_9] : memref<1x128xf32, #tpu.memory_space<vmem>>, vector<1x128xf32>
    %c0_10 = arith.constant 0 : index
    %c0_11 = arith.constant 0 : index
    %c0_12 = arith.constant 0 : index
    %6 = vector.load %arg2[%c0_10, %c0_11, %c0_12] : memref<4x32x128xf32, #tpu.memory_space<vmem>>, vector<1x32x128xf32>
    %7 = vector.shape_cast %6 : vector<1x32x128xf32> to vector<32x128xf32>
    %cst = arith.constant dense<0.000000e+00> : vector<32x128xf32>
    %8 = tpu.matmul %1, %7, %cst {dimension_numbers = #tpu.dot_dimension_numbers<[1], [0], [0], [1], [0, 0, 1, 1], [], []>} : vector<32x32xf32>, vector<32x128xf32>, vector<32x128xf32> -> vector<32x128xf32>
    %cst_13 = arith.constant dense<0.000000e+00> : vector<32x4xf32>
    %9 = tpu.matmul %8, %2, %cst_13 {dimension_numbers = #tpu.dot_dimension_numbers<[1], [0], [0], [1], [0, 0, 1, 1], [], []>} : vector<32x128xf32>, vector<128x4xf32>, vector<32x4xf32> -> vector<32x4xf32>
    %cst_14 = arith.constant dense<0.000000e+00> : vector<32x128xf32>
    %10 = tpu.matmul %9, %3, %cst_14 {dimension_numbers = #tpu.dot_dimension_numbers<[1], [0], [0], [1], [0, 0, 1, 1], [], []>} : vector<32x4xf32>, vector<4x128xf32>, vector<32x128xf32> -> vector<32x128xf32>
    %11 = arith.subf %8, %10 : vector<32x128xf32>
    %12 = arith.mulf %11, %11 : vector<32x128xf32>
    %cst_15 = arith.constant dense<0.000000e+00> : vector<32x4xf32>
    %13 = tpu.matmul %12, %2, %cst_15 {dimension_numbers = #tpu.dot_dimension_numbers<[1], [0], [0], [1], [0, 0, 1, 1], [], []>} : vector<32x128xf32>, vector<128x4xf32>, vector<32x4xf32> -> vector<32x4xf32>
    %cst_16 = arith.constant 9.99999974E-6 : f32
    %14 = vector.broadcast %cst_16 : f32 to vector<32x4xf32>
    %15 = arith.addf %13, %14 : vector<32x4xf32>
    %16 = math.rsqrt %15 : vector<32x4xf32>
    %cst_17 = arith.constant dense<0.000000e+00> : vector<32x128xf32>
    %17 = tpu.matmul %16, %4, %cst_17 {dimension_numbers = #tpu.dot_dimension_numbers<[1], [0], [0], [1], [0, 0, 1, 1], [], []>} : vector<32x4xf32>, vector<4x128xf32>, vector<32x128xf32> -> vector<32x128xf32>
    %18 = arith.mulf %11, %17 : vector<32x128xf32>
    %19 = vector.broadcast %5 : vector<1x128xf32> to vector<32x128xf32>
    %20 = arith.addf %18, %19 : vector<32x128xf32>
    %21 = vector.shape_cast %20 : vector<32x128xf32> to vector<4x8x128xf32>
    %c0_18 = arith.constant 0 : index
    %c0_19 = arith.constant 0 : index
    %c0_20 = arith.constant 0 : index
    %c0_21 = arith.constant 0 : index
    %22 = vector.load %arg7[%c0_18, %c0_19, %c0_20, %c0_21] : memref<4x4x8x128xf32, #tpu.memory_space<vmem>>, vector<4x1x8x128xf32>
    %23 = vector.shape_cast %22 : vector<4x1x8x128xf32> to vector<4x8x128xf32>
    %24 = vector.shape_cast %21 : vector<4x8x128xf32> to vector<4x1x8x128xf32>
    tpu.vector_store %arg7[%c0_18, %c0_19, %c0_20, %c0_21], %24 {strides = array<i32>} : memref<4x4x8x128xf32, #tpu.memory_space<vmem>>, vector<4x1x8x128xf32>,
    %c1 = arith.constant 1 : index
    %c0_22 = arith.constant 0 : index
    %c0_23 = arith.constant 0 : index
    %25 = vector.load %arg2[%c1, %c0_22, %c0_23] : memref<4x32x128xf32, #tpu.memory_space<vmem>>, vector<1x32x128xf32>
    %26 = vector.shape_cast %25 : vector<1x32x128xf32> to vector<32x128xf32>
    %cst_24 = arith.constant dense<0.000000e+00> : vector<32x128xf32>
    %27 = tpu.matmul %1, %26, %cst_24 {dimension_numbers = #tpu.dot_dimension_numbers<[1], [0], [0], [1], [0, 0, 1, 1], [], []>} : vector<32x32xf32>, vector<32x128xf32>, vector<32x128xf32> -> vector<32x128xf32>
    %cst_25 = arith.constant dense<0.000000e+00> : vector<32x4xf32>
    %28 = tpu.matmul %27, %2, %cst_25 {dimension_numbers = #tpu.dot_dimension_numbers<[1], [0], [0], [1], [0, 0, 1, 1], [], []>} : vector<32x128xf32>, vector<128x4xf32>, vector<32x4xf32> -> vector<32x4xf32>
    %cst_26 = arith.constant dense<0.000000e+00> : vector<32x128xf32>
    %29 = tpu.matmul %28, %3, %cst_26 {dimension_numbers = #tpu.dot_dimension_numbers<[1], [0], [0], [1], [0, 0, 1, 1], [], []>} : vector<32x4xf32>, vector<4x128xf32>, vector<32x128xf32> -> vector<32x128xf32>
    %30 = arith.subf %27, %29 : vector<32x128xf32>
    %31 = arith.mulf %30, %30 : vector<32x128xf32>
    %cst_27 = arith.constant dense<0.000000e+00> : vector<32x4xf32>
    %32 = tpu.matmul %31, %2, %cst_27 {dimension_numbers = #tpu.dot_dimension_numbers<[1], [0], [0], [1], [0, 0, 1, 1], [], []>} : vector<32x128xf32>, vector<128x4xf32>, vector<32x4xf32> -> vector<32x4xf32>
    %cst_28 = arith.constant 9.99999974E-6 : f32
    %33 = vector.broadcast %cst_28 : f32 to vector<32x4xf32>
    %34 = arith.addf %32, %33 : vector<32x4xf32>
    %35 = math.rsqrt %34 : vector<32x4xf32>
    %cst_29 = arith.constant dense<0.000000e+00> : vector<32x128xf32>
    %36 = tpu.matmul %35, %4, %cst_29 {dimension_numbers = #tpu.dot_dimension_numbers<[1], [0], [0], [1], [0, 0, 1, 1], [], []>} : vector<32x4xf32>, vector<4x128xf32>, vector<32x128xf32> -> vector<32x128xf32>
    %37 = arith.mulf %30, %36 : vector<32x128xf32>
    %38 = vector.broadcast %5 : vector<1x128xf32> to vector<32x128xf32>
    %39 = arith.addf %37, %38 : vector<32x128xf32>
    %40 = vector.shape_cast %39 : vector<32x128xf32> to vector<4x8x128xf32>
    %c0_30 = arith.constant 0 : index
    %c1_31 = arith.constant 1 : index
    %c0_32 = arith.constant 0 : index
    %c0_33 = arith.constant 0 : index
    %41 = vector.load %arg7[%c0_30, %c1_31, %c0_32, %c0_33] : memref<4x4x8x128xf32, #tpu.memory_space<vmem>>, vector<4x1x8x128xf32>
    %42 = vector.shape_cast %41 : vector<4x1x8x128xf32> to vector<4x8x128xf32>
    %43 = vector.shape_cast %40 : vector<4x8x128xf32> to vector<4x1x8x128xf32>
    tpu.vector_store %arg7[%c0_30, %c1_31, %c0_32, %c0_33], %43 {strides = array<i32>} : memref<4x4x8x128xf32, #tpu.memory_space<vmem>>, vector<4x1x8x128xf32>,
    %c2 = arith.constant 2 : index
    %c0_34 = arith.constant 0 : index
    %c0_35 = arith.constant 0 : index
    %44 = vector.load %arg2[%c2, %c0_34, %c0_35] : memref<4x32x128xf32, #tpu.memory_space<vmem>>, vector<1x32x128xf32>
    %45 = vector.shape_cast %44 : vector<1x32x128xf32> to vector<32x128xf32>
    %cst_36 = arith.constant dense<0.000000e+00> : vector<32x128xf32>
    %46 = tpu.matmul %1, %45, %cst_36 {dimension_numbers = #tpu.dot_dimension_numbers<[1], [0], [0], [1], [0, 0, 1, 1], [], []>} : vector<32x32xf32>, vector<32x128xf32>, vector<32x128xf32> -> vector<32x128xf32>
    %cst_37 = arith.constant dense<0.000000e+00> : vector<32x4xf32>
    %47 = tpu.matmul %46, %2, %cst_37 {dimension_numbers = #tpu.dot_dimension_numbers<[1], [0], [0], [1], [0, 0, 1, 1], [], []>} : vector<32x128xf32>, vector<128x4xf32>, vector<32x4xf32> -> vector<32x4xf32>
    %cst_38 = arith.constant dense<0.000000e+00> : vector<32x128xf32>
    %48 = tpu.matmul %47, %3, %cst_38 {dimension_numbers = #tpu.dot_dimension_numbers<[1], [0], [0], [1], [0, 0, 1, 1], [], []>} : vector<32x4xf32>, vector<4x128xf32>, vector<32x128xf32> -> vector<32x128xf32>
    %49 = arith.subf %46, %48 : vector<32x128xf32>
    %50 = arith.mulf %49, %49 : vector<32x128xf32>
    %cst_39 = arith.constant dense<0.000000e+00> : vector<32x4xf32>
    %51 = tpu.matmul %50, %2, %cst_39 {dimension_numbers = #tpu.dot_dimension_numbers<[1], [0], [0], [1], [0, 0, 1, 1], [], []>} : vector<32x128xf32>, vector<128x4xf32>, vector<32x4xf32> -> vector<32x4xf32>
    %cst_40 = arith.constant 9.99999974E-6 : f32
    %52 = vector.broadcast %cst_40 : f32 to vector<32x4xf32>
    %53 = arith.addf %51, %52 : vector<32x4xf32>
    %54 = math.rsqrt %53 : vector<32x4xf32>
    %cst_41 = arith.constant dense<0.000000e+00> : vector<32x128xf32>
    %55 = tpu.matmul %54, %4, %cst_41 {dimension_numbers = #tpu.dot_dimension_numbers<[1], [0], [0], [1], [0, 0, 1, 1], [], []>} : vector<32x4xf32>, vector<4x128xf32>, vector<32x128xf32> -> vector<32x128xf32>
    %56 = arith.mulf %49, %55 : vector<32x128xf32>
    %57 = vector.broadcast %5 : vector<1x128xf32> to vector<32x128xf32>
    %58 = arith.addf %56, %57 : vector<32x128xf32>
    %59 = vector.shape_cast %58 : vector<32x128xf32> to vector<4x8x128xf32>
    %c0_42 = arith.constant 0 : index
    %c2_43 = arith.constant 2 : index
    %c0_44 = arith.constant 0 : index
    %c0_45 = arith.constant 0 : index
    %60 = vector.load %arg7[%c0_42, %c2_43, %c0_44, %c0_45] : memref<4x4x8x128xf32, #tpu.memory_space<vmem>>, vector<4x1x8x128xf32>
    %61 = vector.shape_cast %60 : vector<4x1x8x128xf32> to vector<4x8x128xf32>
    %62 = vector.shape_cast %59 : vector<4x8x128xf32> to vector<4x1x8x128xf32>
    tpu.vector_store %arg7[%c0_42, %c2_43, %c0_44, %c0_45], %62 {strides = array<i32>} : memref<4x4x8x128xf32, #tpu.memory_space<vmem>>, vector<4x1x8x128xf32>,
    %c3 = arith.constant 3 : index
    %c0_46 = arith.constant 0 : index
    %c0_47 = arith.constant 0 : index
    %63 = vector.load %arg2[%c3, %c0_46, %c0_47] : memref<4x32x128xf32, #tpu.memory_space<vmem>>, vector<1x32x128xf32>
    %64 = vector.shape_cast %63 : vector<1x32x128xf32> to vector<32x128xf32>
    %cst_48 = arith.constant dense<0.000000e+00> : vector<32x128xf32>
    %65 = tpu.matmul %1, %64, %cst_48 {dimension_numbers = #tpu.dot_dimension_numbers<[1], [0], [0], [1], [0, 0, 1, 1], [], []>} : vector<32x32xf32>, vector<32x128xf32>, vector<32x128xf32> -> vector<32x128xf32>
    %cst_49 = arith.constant dense<0.000000e+00> : vector<32x4xf32>
    %66 = tpu.matmul %65, %2, %cst_49 {dimension_numbers = #tpu.dot_dimension_numbers<[1], [0], [0], [1], [0, 0, 1, 1], [], []>} : vector<32x128xf32>, vector<128x4xf32>, vector<32x4xf32> -> vector<32x4xf32>
    %cst_50 = arith.constant dense<0.000000e+00> : vector<32x128xf32>
    %67 = tpu.matmul %66, %3, %cst_50 {dimension_numbers = #tpu.dot_dimension_numbers<[1], [0], [0], [1], [0, 0, 1, 1], [], []>} : vector<32x4xf32>, vector<4x128xf32>, vector<32x128xf32> -> vector<32x128xf32>
    %68 = arith.subf %65, %67 : vector<32x128xf32>
    %69 = arith.mulf %68, %68 : vector<32x128xf32>
    %cst_51 = arith.constant dense<0.000000e+00> : vector<32x4xf32>
    %70 = tpu.matmul %69, %2, %cst_51 {dimension_numbers = #tpu.dot_dimension_numbers<[1], [0], [0], [1], [0, 0, 1, 1], [], []>} : vector<32x128xf32>, vector<128x4xf32>, vector<32x4xf32> -> vector<32x4xf32>
    %cst_52 = arith.constant 9.99999974E-6 : f32
    %71 = vector.broadcast %cst_52 : f32 to vector<32x4xf32>
    %72 = arith.addf %70, %71 : vector<32x4xf32>
    %73 = math.rsqrt %72 : vector<32x4xf32>
    %cst_53 = arith.constant dense<0.000000e+00> : vector<32x128xf32>
    %74 = tpu.matmul %73, %4, %cst_53 {dimension_numbers = #tpu.dot_dimension_numbers<[1], [0], [0], [1], [0, 0, 1, 1], [], []>} : vector<32x4xf32>, vector<4x128xf32>, vector<32x128xf32> -> vector<32x128xf32>
    %75 = arith.mulf %68, %74 : vector<32x128xf32>
    %76 = vector.broadcast %5 : vector<1x128xf32> to vector<32x128xf32>
    %77 = arith.addf %75, %76 : vector<32x128xf32>
    %78 = vector.shape_cast %77 : vector<32x128xf32> to vector<4x8x128xf32>
    %c0_54 = arith.constant 0 : index
    %c3_55 = arith.constant 3 : index
    %c0_56 = arith.constant 0 : index
    %c0_57 = arith.constant 0 : index
    %79 = vector.load %arg7[%c0_54, %c3_55, %c0_56, %c0_57] : memref<4x4x8x128xf32, #tpu.memory_space<vmem>>, vector<4x1x8x128xf32>
    %80 = vector.shape_cast %79 : vector<4x1x8x128xf32> to vector<4x8x128xf32>
    %81 = vector.shape_cast %78 : vector<4x8x128xf32> to vector<4x1x8x128xf32>
    tpu.vector_store %arg7[%c0_54, %c3_55, %c0_56, %c0_57], %81 {strides = array<i32>} : memref<4x4x8x128xf32, #tpu.memory_space<vmem>>, vector<4x1x8x128xf32>,
    return
  }
  func.func @transform_0(%arg0: i32) -> (i32, i32, i32) {
    %c0_i32 = arith.constant 0 : i32
    %c0_i32_0 = arith.constant 0 : i32
    %c0_i32_1 = arith.constant 0 : i32
    return %arg0, %c0_i32, %c0_i32_0 : i32, i32, i32
  }
  func.func @transform_1(%arg0: i32) -> (i32, i32, i32) {
    %c0_i32 = arith.constant 0 : i32
    %c0_i32_0 = arith.constant 0 : i32
    %c0_i32_1 = arith.constant 0 : i32
    %c0_i32_2 = arith.constant 0 : i32
    return %c0_i32, %c0_i32_0, %c0_i32_1 : i32, i32, i32
  }
  func.func @transform_2(%arg0: i32) -> (i32, i32) {
    %c0_i32 = arith.constant 0 : i32
    %c0_i32_0 = arith.constant 0 : i32
    %c0_i32_1 = arith.constant 0 : i32
    return %c0_i32, %c0_i32_0 : i32, i32
  }
  func.func @transform_3(%arg0: i32) -> (i32, i32) {
    %c0_i32 = arith.constant 0 : i32
    %c0_i32_0 = arith.constant 0 : i32
    %c0_i32_1 = arith.constant 0 : i32
    return %c0_i32, %c0_i32_0 : i32, i32
  }
  func.func @transform_4(%arg0: i32) -> (i32, i32) {
    %c0_i32 = arith.constant 0 : i32
    %c0_i32_0 = arith.constant 0 : i32
    %c0_i32_1 = arith.constant 0 : i32
    return %c0_i32, %c0_i32_0 : i32, i32
  }
  func.func @transform_5(%arg0: i32) -> (i32, i32) {
    %c0_i32 = arith.constant 0 : i32
    %c0_i32_0 = arith.constant 0 : i32
    %c0_i32_1 = arith.constant 0 : i32
    return %c0_i32, %c0_i32_0 : i32, i32
  }
  func.func @transform_6(%arg0: i32) -> (i32, i32, i32, i32) {
    %c0_i32 = arith.constant 0 : i32
    %c0_i32_0 = arith.constant 0 : i32
    %c0_i32_1 = arith.constant 0 : i32
    %c0_i32_2 = arith.constant 0 : i32
    return %arg0, %c0_i32, %c0_i32_0, %c0_i32_1 : i32, i32, i32, i32
  }
}

</mosaic_0001>

<llo_original>
// kernel: tpu_custom_call.1
$region0: #{tpu_custom_call.1}
  #allocation0 [shape = 'u32[]', space=smem, size = 0x4, offset = 0x4, fixed_abs, tag = 'smem constant byte address 0x4 - core index']
  #allocation1 [shape = 'u32[72,128]{1,0:T(1,128)}', space=vmem, size = 0x9000, scoped, tag = 'internal scratch']
  %s0 = inlined_call_operand.vmem [shape: f32[16,8,32], index: 0, kind: input, shape index: {}]
  %s1 = inlined_call_operand.hbm [shape: f32[4,32,128], index: 1, kind: input, shape index: {}]
  %s2 = inlined_call_operand.vmem [shape: f32[128,4], index: 2, kind: input, shape index: {}]
  %s3 = inlined_call_operand.vmem [shape: f32[4,128], index: 3, kind: input, shape index: {}]
  %s4 = inlined_call_operand.hbm [shape: f32[4,128], index: 4, kind: input, shape index: {}]
  %s5 = inlined_call_operand.vmem [shape: f32[1,128], index: 5, kind: input, shape index: {}]
  %s6 = inlined_call_operand.hbm [shape: f32[16,4,8,128], index: 6, kind: output, shape index: {}]
  %s7 = sld [smem:[#allocation0]]
  $region65: #{tpu_custom_call.1} parent=0
    _
  %s9 = ssub.s32 1, %s7
  %s10 = scalar_select 0, %s9, %s7
  $region1: #{tpu_custom_call.1} parent=0
    #allocation2 [shape = 'u8[65536]{0}', space=vmem, size = 0x10000, scoped, tag = 'input window, operand 1, single buffered']
    #allocation3 [shape = 's32[2]{0}', space=sflag, size = 0x8, scoped, tag = 'scoped memory for tpu_custom_call.1']
    #allocation4 [shape = 's32[2]{0}', space=sflag, size = 0x8, scoped, tag = 'scoped memory for tpu_custom_call.1']
    #allocation5 [shape = 'u8[2048]{0}', space=vmem, size = 0x800, scoped, tag = 'input window, operand 4, single buffered']
    #allocation6 [shape = 's32[1]{0}', space=sflag, size = 0x4, scoped, tag = 'scoped memory for tpu_custom_call.1']
    #allocation7 [shape = 'u8[131072]{0}', space=vmem, size = 0x20000, scoped, tag = 'output window, operand 0']
    %11 = vsyncpa [#allocation3], 0
    %12 = vsyncpa [#allocation6], 0
    %13 = vsyncpa [#allocation4], 0
    %s14 = scalar_lea.sflag [#allocation4], 1
    %15 = vsyncpa %s14, 0
    loop: start=0, step=1, limit=6
    $region2: #{tpu_custom_call.1} parent=1 // loop_pre_header
      _
    $region3: #{tpu_custom_call.1} parent=1 // loop_header
      %s17 = sphi 0, %s21
      %p18 = scmp.ge.s32.totalorder %s17, 6
      %s27 = sphi 0, %s29
      %s30 = sphi 0, %s27
      %s31 = sphi 0, %s30
      %s47 = sphi 0, %s31
      %s51 = sphi 0, %s51
      %s53 = sphi 0, %s51
      %s54 = sphi 0, %s53
      %s68 = sphi 0, %s54
      %s72 = sphi 0, %s72
      %s74 = sphi 0, %s72
      %s75 = sphi 0, %s74
      %s89 = sphi 0, %s75
      %s93 = sphi 0, %s93
      %s95 = sphi 0, %s93
      %s96 = sphi 0, %s95
      %s110 = sphi 0, %s96
      %s114 = sphi 0, %s114
      %s116 = sphi 0, %s114
      %s117 = sphi 0, %s116
      %s131 = sphi 0, %s117
      %s135 = sphi 0, %s135
      %s137 = sphi 0, %s135
      %s138 = sphi 0, %s137
      %s152 = sphi 0, %s138
      %s158 = sphi 0, %s160
      %s161 = sphi 0, %s158
      %s162 = sphi 0, %s161
      %s178 = sphi 0, %s162
    $region4: #{tpu_custom_call.1} parent=1 // loop_header_branch
      %20 = sbr.rel (%p18) target = $region8
    $region5: #{tpu_custom_call.1} parent=1 // loop_body
      %s22 = ssub.s32 %s17, 1
      %s23 = ssub.s32 %s17, 2
      %s24 = sadd.s32 %s17, 1
      %s25 = ssub.s32 %s17, %s24
      %p26 = scmp.eq.s32.totalorder %s25, 0
      %s28 = sadd.s32 %s27, 1
      %s29 = scalar_select %p26, %s27, %s28
      %p32 = pneg %p26
      %p33 = scmp.eq.s32.totalorder %s17, 3
      %p34 = por %p32, %p33
      %p35 = scmp.ne.s32.totalorder %s27, %s30
      %p36 = scmp.eq.s32.totalorder %s17, 0
      %p37 = por %p35, %p36
      %p38 = scmp.ne.s32.totalorder %s27, %s30
      %p39 = scmp.eq.s32.totalorder %s22, 3
      %p40 = por %p38, %p39
      %p41 = scmp.ne.s32.totalorder %s30, %s31
      %p42 = scmp.eq.s32.totalorder %s22, 0
      %p43 = por %p41, %p42
      %p44 = scmp.ne.s32.totalorder %s30, %s31
      %p45 = scmp.eq.s32.totalorder %s23, 3
      %p46 = por %p44, %p45
      %p48 = scmp.ne.s32.totalorder %s31, %s47
      %p49 = scmp.eq.s32.totalorder %s23, 0
      %p50 = por %p48, %p49
      %s52 = sadd.s32 %s51, 1
      %p55 = scmp.eq.s32.totalorder %s17, 3
      %p56 = scmp.ne.s32.totalorder %s51, %s53
      %p57 = scmp.eq.s32.totalorder %s17, 0
      %p58 = por %p56, %p57
      %p59 = scmp.ne.s32.totalorder %s51, %s53
      %p60 = scmp.eq.s32.totalorder %s22, 3
      %p61 = por %p59, %p60
      %p62 = scmp.ne.s32.totalorder %s53, %s54
      %p63 = scmp.eq.s32.totalorder %s22, 0
      %p64 = por %p62, %p63
      %p65 = scmp.ne.s32.totalorder %s53, %s54
      %p66 = scmp.eq.s32.totalorder %s23, 3
      %p67 = por %p65, %p66
      %p69 = scmp.ne.s32.totalorder %s54, %s68
      %p70 = scmp.eq.s32.totalorder %s23, 0
      %p71 = por %p69, %p70
      %s73 = sadd.s32 %s72, 1
      %p76 = scmp.eq.s32.totalorder %s17, 3
      %p77 = scmp.ne.s32.totalorder %s72, %s74
      %p78 = scmp.eq.s32.totalorder %s17, 0
      %p79 = por %p77, %p78
      %p80 = scmp.ne.s32.totalorder %s72, %s74
      %p81 = scmp.eq.s32.totalorder %s22, 3
      %p82 = por %p80, %p81
      %p83 = scmp.ne.s32.totalorder %s74, %s75
      %p84 = scmp.eq.s32.totalorder %s22, 0
      %p85 = por %p83, %p84
      %p86 = scmp.ne.s32.totalorder %s74, %s75
      %p87 = scmp.eq.s32.totalorder %s23, 3
      %p88 = por %p86, %p87
      %p90 = scmp.ne.s32.totalorder %s75, %s89
      %p91 = scmp.eq.s32.totalorder %s23, 0
      %p92 = por %p90, %p91
      %s94 = sadd.s32 %s93, 1
      %p97 = scmp.eq.s32.totalorder %s17, 3
      %p98 = scmp.ne.s32.totalorder %s93, %s95
      %p99 = scmp.eq.s32.totalorder %s17, 0
      %p100 = por %p98, %p99
      %p101 = scmp.ne.s32.totalorder %s93, %s95
      %p102 = scmp.eq.s32.totalorder %s22, 3
      %p103 = por %p101, %p102
      %p104 = scmp.ne.s32.totalorder %s95, %s96
      %p105 = scmp.eq.s32.totalorder %s22, 0
      %p106 = por %p104, %p105
      %p107 = scmp.ne.s32.totalorder %s95, %s96
      %p108 = scmp.eq.s32.totalorder %s23, 3
      %p109 = por %p107, %p108
      %p111 = scmp.ne.s32.totalorder %s96, %s110
      %p112 = scmp.eq.s32.totalorder %s23, 0
      %p113 = por %p111, %p112
      %s115 = sadd.s32 %s114, 1
      %p118 = scmp.eq.s32.totalorder %s17, 3
      %p119 = scmp.ne.s32.totalorder %s114, %s116
      %p120 = scmp.eq.s32.totalorder %s17, 0
      %p121 = por %p119, %p120
      %p122 = scmp.ne.s32.totalorder %s114, %s116
      %p123 = scmp.eq.s32.totalorder %s22, 3
      %p124 = por %p122, %p123
      %p125 = scmp.ne.s32.totalorder %s116, %s117
      %p126 = scmp.eq.s32.totalorder %s22, 0
      %p127 = por %p125, %p126
      %p128 = scmp.ne.s32.totalorder %s116, %s117
      %p129 = scmp.eq.s32.totalorder %s23, 3
      %p130 = por %p128, %p129
      %p132 = scmp.ne.s32.totalorder %s117, %s131
      %p133 = scmp.eq.s32.totalorder %s23, 0
      %p134 = por %p132, %p133
      %s136 = sadd.s32 %s135, 1
      %p139 = scmp.eq.s32.totalorder %s17, 3
      %p140 = scmp.ne.s32.totalorder %s135, %s137
      %p141 = scmp.eq.s32.totalorder %s17, 0
      %p142 = por %p140, %p141
      %p143 = scmp.ne.s32.totalorder %s135, %s137
      %p144 = scmp.eq.s32.totalorder %s22, 3
      %p145 = por %p143, %p144
      %p146 = scmp.ne.s32.totalorder %s137, %s138
      %p147 = scmp.eq.s32.totalorder %s22, 0
      %p148 = por %p146, %p147
      %p149 = scmp.ne.s32.totalorder %s137, %s138
      %p150 = scmp.eq.s32.totalorder %s23, 3
      %p151 = por %p149, %p150
      %p153 = scmp.ne.s32.totalorder %s138, %s152
      %p154 = scmp.eq.s32.totalorder %s23, 0
      %p155 = por %p153, %p154
      %s156 = ssub.s32 %s17, %s24
      %p157 = scmp.eq.s32.totalorder %s156, 0
      %s159 = sadd.s32 %s158, 1
      %s160 = scalar_select %p157, %s158, %s159
      %p163 = pneg %p157
      %p164 = scmp.eq.s32.totalorder %s17, 3
      %p165 = por %p163, %p164
      %p166 = scmp.ne.s32.totalorder %s158, %s161
      %p167 = scmp.eq.s32.totalorder %s17, 0
      %p168 = por %p166, %p167
      %p169 = scmp.ne.s32.totalorder %s158, %s161
      %p170 = scmp.eq.s32.totalorder %s22, 3
      %p171 = por %p169, %p170
      %p172 = scmp.ne.s32.totalorder %s161, %s162
      %p173 = scmp.eq.s32.totalorder %s22, 0
      %p174 = por %p172, %p173
      %p175 = scmp.ne.s32.totalorder %s161, %s162
      %p176 = scmp.eq.s32.totalorder %s23, 3
      %p177 = por %p175, %p176
      %p179 = scmp.ne.s32.totalorder %s162, %s178
      %p180 = scmp.eq.s32.totalorder %s23, 0
      %p181 = por %p179, %p180
      %p182 = scmp.le.s32.totalorder 1, %s17
      %p183 = scmp.lt.s32.totalorder %s17, 5
      %p184 = pnand %p182, %p183
      %p185 = pneg %p184
      // Predicated region
      $region9: #{tpu_custom_call.1} parent=5 // pred_check
        _
      $region10: #{tpu_custom_call.1} parent=5 // pred_check_branch
        %187 = sbr.rel (%p184) target = $region12
      $region11: #{tpu_custom_call.1} parent=5 // pred_region
        %s188 = ssub.s32 %s17, 1
        // Predicated region
        $region13: #{tpu_custom_call.1} parent=11 // pred_check
          %p189 = pneg %p64
        $region14: #{tpu_custom_call.1} parent=11 // pred_check_branch
          %191 = sbr.rel (%p189) target = $region16
        $region15: #{tpu_custom_call.1} parent=11 // pred_region
          %193 = vsyncadd [#allocation3], 0
          %s194 = sshll.u32 %s1, 4
          %s195 = int_to_ptr.hbm [resolvable:$true] %s194
          %s196 = sshll.u32 [#allocation2], 4
          %s197 = int_to_ptr.vmem [resolvable:$true] %s196
          %202 = dma.hbm_to_vmem [thread:$0]  %s195, 2048, %s197, [#allocation3], 128, 128, 8
        $region16: #{tpu_custom_call.1} parent=11 // pred_fallthru
          _
        // Predicated region
        $region17: #{tpu_custom_call.1} parent=11 // pred_check
          %p203 = pneg %p85
        $region18: #{tpu_custom_call.1} parent=11 // pred_check_branch
          %205 = sbr.rel (%p203) target = $region20
        $region19: #{tpu_custom_call.1} parent=11 // pred_region
          _
        $region20: #{tpu_custom_call.1} parent=11 // pred_fallthru
          _
        // Predicated region
        $region21: #{tpu_custom_call.1} parent=11 // pred_check
          %p206 = pneg %p106
        $region22: #{tpu_custom_call.1} parent=11 // pred_check_branch
          %208 = sbr.rel (%p206) target = $region24
        $region23: #{tpu_custom_call.1} parent=11 // pred_region
          _
        $region24: #{tpu_custom_call.1} parent=11 // pred_fallthru
          _
        // Predicated region
        $region25: #{tpu_custom_call.1} parent=11 // pred_check
          %p209 = pneg %p127
        $region26: #{tpu_custom_call.1} parent=11 // pred_check_branch
          %211 = sbr.rel (%p209) target = $region28
        $region27: #{tpu_custom_call.1} parent=11 // pred_region
          %213 = vsyncadd [#allocation6], 0
          %s215 = sshll.u32 %s4, 4
          %s216 = int_to_ptr.hbm [resolvable:$true] %s215
          %s217 = sshll.u32 [#allocation5], 4
          %s218 = int_to_ptr.vmem [resolvable:$true] %s217
          %220 = dma.hbm_to_vmem [thread:$0]  %s216, 64, %s218, [#allocation6]
        $region28: #{tpu_custom_call.1} parent=11 // pred_fallthru
          _
        // Predicated region
        $region29: #{tpu_custom_call.1} parent=11 // pred_check
          %p221 = pneg %p148
        $region30: #{tpu_custom_call.1} parent=11 // pred_check_branch
          %223 = sbr.rel (%p221) target = $region32
        $region31: #{tpu_custom_call.1} parent=11 // pred_region
          _
        $region32: #{tpu_custom_call.1} parent=11 // pred_fallthru
          _
      $region12: #{tpu_custom_call.1} parent=5 // pred_fallthru
        _
      %p224 = scmp.lt.s32.totalorder %s17, 4
      // Predicated region
      $region33: #{tpu_custom_call.1} parent=5 // pred_check
        %p225 = pneg %p224
      $region34: #{tpu_custom_call.1} parent=5 // pred_check_branch
        %227 = sbr.rel (%p225) target = $region36
      $region35: #{tpu_custom_call.1} parent=5 // pred_region
        // Predicated region
        $region37: #{tpu_custom_call.1} parent=35 // pred_check
          %p228 = pneg %p37
        $region38: #{tpu_custom_call.1} parent=35 // pred_check_branch
          %230 = sbr.rel (%p228) target = $region40
        $region39: #{tpu_custom_call.1} parent=35 // pred_region
          %s231 = smul.u32 4, %s17
          %p232 = scmp.lt.s32.totalorder %s231, 15
          %s233 = scalar_select %p232, %s231, 15
          %s234 = smul.addr %s233, 8
          %s235 = scalar_lea.vmem %s0, %s234
          %s236 = smul.u32 4, %s17
        $region40: #{tpu_custom_call.1} parent=35 // pred_fallthru
          _
      $region36: #{tpu_custom_call.1} parent=5 // pred_fallthru
        _
      %p237 = scmp.le.s32.totalorder 1, %s17
      %p238 = scmp.lt.s32.totalorder %s17, 5
      %p239 = pnand %p237, %p238
      %p240 = pneg %p239
      // Predicated region
      $region41: #{tpu_custom_call.1} parent=5 // pred_check
        _
      $region42: #{tpu_custom_call.1} parent=5 // pred_check_branch
        %242 = sbr.rel (%p239) target = $region44
      $region43: #{tpu_custom_call.1} parent=5 // pred_region
        %s243 = ssub.s32 %s17, 1
        // Predicated region
        $region45: #{tpu_custom_call.1} parent=43 // pred_check
          %p244 = pneg %p64
        $region46: #{tpu_custom_call.1} parent=43 // pred_check_branch
          %246 = sbr.rel (%p244) target = $region48
        $region47: #{tpu_custom_call.1} parent=43 // pred_region
          %248 = dma.done [#allocation3], 2048
        $region48: #{tpu_custom_call.1} parent=43 // pred_fallthru
          _
        // Predicated region
        $region49: #{tpu_custom_call.1} parent=43 // pred_check
          %p249 = pneg %p127
        $region50: #{tpu_custom_call.1} parent=43 // pred_check_branch
          %251 = sbr.rel (%p249) target = $region52
        $region51: #{tpu_custom_call.1} parent=43 // pred_region
          %253 = dma.done [#allocation6], 64
        $region52: #{tpu_custom_call.1} parent=43 // pred_fallthru
          _
        %s254 = smul.u32 4, %s22
        %p255 = scmp.lt.s32.totalorder %s254, 15
        %s256 = scalar_select %p255, %s254, 15
        %s257 = smul.addr %s256, 8
        %s258 = scalar_lea.vmem %s0, %s257
        %p259 = pneg %p43
        %p260 = pneg %p40
        %p261 = pneg %p64
        %p262 = pneg %p61
        %p263 = pneg %p85
        %p264 = pneg %p82
        %p265 = pneg %p106
        %p266 = pneg %p103
        %p267 = pneg %p127
        %p268 = pneg %p124
        %p269 = pneg %p148
        %p270 = pneg %p145
        %p271 = pneg %p174
        %p272 = pneg %p171
        %s273 = sand.u32 %s161, 1
        %s274 = scalar_lea.sflag [#allocation4], %s273
        %s275 = sand.u32 %s161, 1
        %s276 = smul.addr %s275, 128
        %s277 = scalar_lea.vmem [#allocation7], %s276
        %s278 = smul.u32 4, %s22
        %p279 = scmp.lt.s32.totalorder %s278, 15
        %s280 = scalar_select %p279, %s278, 15
        %s281 = smul.addr %s280, 8
        %s282 = scalar_lea.vmem %s0, %s281
        %s283 = smul.u32 4, %s22
        %s284 = smul.u32 4, %s22
        %v285 = vld [vmem:[%s282] sm:$0xff]
        %v286 = vld [vmem:[%s282 + $0x8] sm:$0xff]
        %v287 = vld [vmem:[%s282 + $0x10] sm:$0xff]
        %v288 = vld [vmem:[%s282 + $0x18] sm:$0xff]
        %v289 = vld [vmem:[%s2] sm:$0xff]
        %v290 = vld [vmem:[%s2 + $0x8] sm:$0xff]
        %v291 = vld [vmem:[%s2 + $0x10] sm:$0xff]
        %v292 = vld [vmem:[%s2 + $0x18] sm:$0xff]
        %v293 = vld [vmem:[%s2 + $0x20] sm:$0xff]
        %v294 = vld [vmem:[%s2 + $0x28] sm:$0xff]
        %v295 = vld [vmem:[%s2 + $0x30] sm:$0xff]
        %v296 = vld [vmem:[%s2 + $0x38] sm:$0xff]
        %v297 = vld [vmem:[%s2 + $0x40] sm:$0xff]
        %v298 = vld [vmem:[%s2 + $0x48] sm:$0xff]
        %v299 = vld [vmem:[%s2 + $0x50] sm:$0xff]
        %v300 = vld [vmem:[%s2 + $0x58] sm:$0xff]
        %v301 = vld [vmem:[%s2 + $0x60] sm:$0xff]
        %v302 = vld [vmem:[%s2 + $0x68] sm:$0xff]
        %v303 = vld [vmem:[%s2 + $0x70] sm:$0xff]
        %v304 = vld [vmem:[%s2 + $0x78] sm:$0xff]
        %v305 = vld [vmem:[%s3] sm:$0xf]
        %v306 = vld [vmem:[#allocation5] sm:$0xf]
        %v307 = vld [vmem:[%s5] sm:$0x1]
        %v308 = vld [vmem:[#allocation2] sm:$0xff]
        %v309 = vld [vmem:[#allocation2 + $0x8] sm:$0xff]
        %v310 = vld [vmem:[#allocation2 + $0x10] sm:$0xff]
        %v311 = vld [vmem:[#allocation2 + $0x18] sm:$0xff]
        %vm312 = vcmask 261120
        %v314 = vsel %vm312, %v285, 0
        %v317 = vsel %vm312, %v286, 0
        %v320 = vsel %vm312, %v287, 0
        %v323 = vsel %vm312, %v288, 0
        %325 = vmatpush.msra.mxu0 0.0
        %326 = vmatpush.msra.mxu0 0.0
        %327 = vmatpush.msra.mxu0 0.0
        %328 = vmatpush.msra.mxu0 0.0
        %329 = vmatpush.msra.mxu0 0.0
        %330 = vmatpush.msra.mxu0 0.0
        %331 = vmatpush.msra.mxu0 0.0
        %332 = vmatpush.msra.mxu0 0.0
        %333 = vmatpush.msra.mxu0 0.0
        %334 = vmatpush.msra.mxu0 0.0
        %335 = vmatpush.msra.mxu0 0.0
        %336 = vmatpush.msra.mxu0 0.0
        %337 = vmatpush.msra.mxu0 %v311
        %338 = vmatpush.msra.mxu0 %v310
        %339 = vmatpush.msra.mxu0 %v309
        %340 = vmatpush.msra.mxu0 %v308
        %341 = vmatmul.f32.gmra.mxu0 %v314
        %v342 = vpop.f32.mrf.mxu0
        %v343 = vadd.f32 0.0, %v342
        %344 = vmatmul.f32.gmra.mxu0 %v317
        %v345 = vpop.f32.mrf.mxu0
        %v346 = vadd.f32 0.0, %v345
        %347 = vmatmul.f32.gmra.mxu0 %v320
        %v348 = vpop.f32.mrf.mxu0
        %v349 = vadd.f32 0.0, %v348
        %350 = vmatmul.f32.gmra.mxu0 %v323
        %v351 = vpop.f32.mrf.mxu0
        %v352 = vadd.f32 0.0, %v351
        %353 = vdwg.mxu0
        %354 = vmatpush.msra.mxu0 %v304
        %355 = vmatpush.msra.mxu0 %v303
        %356 = vmatpush.msra.mxu0 %v302
        %357 = vmatpush.msra.mxu0 %v301
        %358 = vmatpush.msra.mxu0 %v300
        %359 = vmatpush.msra.mxu0 %v299
        %360 = vmatpush.msra.mxu0 %v298
        %361 = vmatpush.msra.mxu0 %v297
        %362 = vmatpush.msra.mxu0 %v296
        %363 = vmatpush.msra.mxu0 %v295
        %364 = vmatpush.msra.mxu0 %v294
        %365 = vmatpush.msra.mxu0 %v293
        %366 = vmatpush.msra.mxu0 %v292
        %367 = vmatpush.msra.mxu0 %v291
        %368 = vmatpush.msra.mxu0 %v290
        %369 = vmatpush.msra.mxu0 %v289
        %370 = vmatmul.f32.gmra.mxu0 %v343
        %v371 = vpop.f32.mrf.mxu0
        %v372 = vadd.f32 0.0, %v371
        %373 = vmatmul.f32.gmra.mxu0 %v346
        %v374 = vpop.f32.mrf.mxu0
        %v375 = vadd.f32 0.0, %v374
        %376 = vmatmul.f32.gmra.mxu0 %v349
        %v377 = vpop.f32.mrf.mxu0
        %v378 = vadd.f32 0.0, %v377
        %379 = vmatmul.f32.gmra.mxu0 %v352
        %v380 = vpop.f32.mrf.mxu0
        %v381 = vadd.f32 0.0, %v380
        %382 = vdwg.mxu0
        %vm383 = vcmask 31744
        %v385 = vsel %vm383, %v372, 0
        %v388 = vsel %vm383, %v375, 0
        %v391 = vsel %vm383, %v378, 0
        %v394 = vsel %vm383, %v381, 0
        %vm396 = vcmask 1043456
        %v398 = vsel %vm396, %v305, 0
        %400 = vmatpush.msra.mxu0 0.0
        %401 = vmatpush.msra.mxu0 0.0
        %402 = vmatpush.msra.mxu0 0.0
        %403 = vmatpush.msra.mxu0 0.0
        %404 = vmatpush.msra.mxu0 0.0
        %405 = vmatpush.msra.mxu0 0.0
        %406 = vmatpush.msra.mxu0 0.0
        %407 = vmatpush.msra.mxu0 0.0
        %408 = vmatpush.msra.mxu0 0.0
        %409 = vmatpush.msra.mxu0 0.0
        %410 = vmatpush.msra.mxu0 0.0
        %411 = vmatpush.msra.mxu0 0.0
        %412 = vmatpush.msra.mxu0 0.0
        %413 = vmatpush.msra.mxu0 0.0
        %414 = vmatpush.msra.mxu0 0.0
        %415 = vmatpush.msra.mxu0 %v398
        %416 = vmatmul.f32.gmra.mxu0 %v385
        %v417 = vpop.f32.mrf.mxu0
        %v418 = vadd.f32 0.0, %v417
        %419 = vmatmul.f32.gmra.mxu0 %v388
        %v420 = vpop.f32.mrf.mxu0
        %v421 = vadd.f32 0.0, %v420
        %422 = vmatmul.f32.gmra.mxu0 %v391
        %v423 = vpop.f32.mrf.mxu0
        %v424 = vadd.f32 0.0, %v423
        %425 = vmatmul.f32.gmra.mxu0 %v394
        %v426 = vpop.f32.mrf.mxu0
        %v427 = vadd.f32 0.0, %v426
        %428 = vdwg.mxu0
        %v429 = vsub.f32 %v343, %v418
        %v430 = vsub.f32 %v346, %v421
        %v431 = vsub.f32 %v349, %v424
        %v432 = vsub.f32 %v352, %v427
        %v433 = vmul.f32 %v429, %v429
        %v434 = vmul.f32 %v430, %v430
        %v435 = vmul.f32 %v431, %v431
        %v436 = vmul.f32 %v432, %v432
        %437 = vmatpush.msra.mxu0 %v304
        %438 = vmatpush.msra.mxu0 %v303
        %439 = vmatpush.msra.mxu0 %v302
        %440 = vmatpush.msra.mxu0 %v301
        %441 = vmatpush.msra.mxu0 %v300
        %442 = vmatpush.msra.mxu0 %v299
        %443 = vmatpush.msra.mxu0 %v298
        %444 = vmatpush.msra.mxu0 %v297
        %445 = vmatpush.msra.mxu0 %v296
        %446 = vmatpush.msra.mxu0 %v295
        %447 = vmatpush.msra.mxu0 %v294
        %448 = vmatpush.msra.mxu0 %v293
        %449 = vmatpush.msra.mxu0 %v292
        %450 = vmatpush.msra.mxu0 %v291
        %451 = vmatpush.msra.mxu0 %v290
        %452 = vmatpush.msra.mxu0 %v289
        %453 = vmatmul.f32.gmra.mxu0 %v433
        %v454 = vpop.f32.mrf.mxu0
        %v455 = vadd.f32 1e-05, %v454
        %456 = vmatmul.f32.gmra.mxu0 %v434
        %v457 = vpop.f32.mrf.mxu0
        %v458 = vadd.f32 1e-05, %v457
        %459 = vmatmul.f32.gmra.mxu0 %v435
        %v460 = vpop.f32.mrf.mxu0
        %v461 = vadd.f32 1e-05, %v460
        %462 = vmatmul.f32.gmra.mxu0 %v436
        %v463 = vpop.f32.mrf.mxu0
        %v464 = vadd.f32 1e-05, %v463
        %465 = vdwg.mxu0
        %v466 = vrsqrt.pop %v455
        %v467 = vmul.f32 %v466, %v455
        %v468 = vmul.f32 %v467, %v466
        %v469 = vmul.f32 0.5, %v468
        %v470 = vsub.f32 1.5, %v469
        %v471 = vmul.f32 %v466, %v470
        %vm472 = vweird.f32 %v455
        %vm473 = vweird.f32 %v466
        %vm474 = vmor %vm472, %vm473
        %v475 = vsel %vm474, %v466, %v471
        %v476 = vrsqrt.pop %v458
        %v477 = vmul.f32 %v476, %v458
        %v478 = vmul.f32 %v477, %v476
        %v479 = vmul.f32 0.5, %v478
        %v480 = vsub.f32 1.5, %v479
        %v481 = vmul.f32 %v476, %v480
        %vm482 = vweird.f32 %v458
        %vm483 = vweird.f32 %v476
        %vm484 = vmor %vm482, %vm483
        %v485 = vsel %vm484, %v476, %v481
        %v486 = vrsqrt.pop %v461
        %v487 = vmul.f32 %v486, %v461
        %v488 = vmul.f32 %v487, %v486
        %v489 = vmul.f32 0.5, %v488
        %v490 = vsub.f32 1.5, %v489
        %v491 = vmul.f32 %v486, %v490
        %vm492 = vweird.f32 %v461
        %vm493 = vweird.f32 %v486
        %vm494 = vmor %vm492, %vm493
        %v495 = vsel %vm494, %v486, %v491
        %v496 = vrsqrt.pop %v464
        %v497 = vmul.f32 %v496, %v464
        %v498 = vmul.f32 %v497, %v496
        %v499 = vmul.f32 0.5, %v498
        %v500 = vsub.f32 1.5, %v499
        %v501 = vmul.f32 %v496, %v500
        %vm502 = vweird.f32 %v464
        %vm503 = vweird.f32 %v496
        %vm504 = vmor %vm502, %vm503
        %v505 = vsel %vm504, %v496, %v501
        %v507 = vsel %vm383, %v475, 0
        %v510 = vsel %vm383, %v485, 0
        %v513 = vsel %vm383, %v495, 0
        %v516 = vsel %vm383, %v505, 0
        %v519 = vsel %vm396, %v306, 0
        %521 = vmatpush.msra.mxu0 0.0
        %522 = vmatpush.msra.mxu0 0.0
        %523 = vmatpush.msra.mxu0 0.0
        %524 = vmatpush.msra.mxu0 0.0
        %525 = vmatpush.msra.mxu0 0.0
        %526 = vmatpush.msra.mxu0 0.0
        %527 = vmatpush.msra.mxu0 0.0
        %528 = vmatpush.msra.mxu0 0.0
        %529 = vmatpush.msra.mxu0 0.0
        %530 = vmatpush.msra.mxu0 0.0
        %531 = vmatpush.msra.mxu0 0.0
        %532 = vmatpush.msra.mxu0 0.0
        %533 = vmatpush.msra.mxu0 0.0
        %534 = vmatpush.msra.mxu0 0.0
        %535 = vmatpush.msra.mxu0 0.0
        %536 = vmatpush.msra.mxu0 %v519
        %537 = vmatmul.f32.gmra.mxu0 %v507
        %v538 = vpop.f32.mrf.mxu0
        %v539 = vadd.f32 0.0, %v538
        %540 = vmatmul.f32.gmra.mxu0 %v510
        %v541 = vpop.f32.mrf.mxu0
        %v542 = vadd.f32 0.0, %v541
        %543 = vmatmul.f32.gmra.mxu0 %v513
        %v544 = vpop.f32.mrf.mxu0
        %v545 = vadd.f32 0.0, %v544
        %546 = vmatmul.f32.gmra.mxu0 %v516
        %v547 = vpop.f32.mrf.mxu0
        %v548 = vadd.f32 0.0, %v547
        %549 = vdwg.mxu0
        %v550 = vmul.f32 %v429, %v539
        %v551 = vmul.f32 %v430, %v542
        %v552 = vmul.f32 %v431, %v545
        %v553 = vmul.f32 %v432, %v548
        %v555 = vperm.slane %v307, 0
        %v557 = vadd.f32 %v550, %v555
        %v558 = vadd.f32 %v551, %v555
        %v559 = vadd.f32 %v552, %v555
        %v560 = vadd.f32 %v553, %v555
        %561 = vst [vmem:[%s277] sm:$0xff] %v557
        %562 = vst [vmem:[%s277 + $0x20] sm:$0xff] %v558
        %563 = vst [vmem:[%s277 + $0x40] sm:$0xff] %v559
        %564 = vst [vmem:[%s277 + $0x60] sm:$0xff] %v560
        %s565 = scalar_lea.vmem [#allocation2], 32
        %v566 = vld [vmem:[%s565] sm:$0xff]
        %v567 = vld [vmem:[%s565 + $0x8] sm:$0xff]
        %v568 = vld [vmem:[%s565 + $0x10] sm:$0xff]
        %v569 = vld [vmem:[%s565 + $0x18] sm:$0xff]
        %570 = vmatpush.msra.mxu0 0.0
        %571 = vmatpush.msra.mxu0 0.0
        %572 = vmatpush.msra.mxu0 0.0
        %573 = vmatpush.msra.mxu0 0.0
        %574 = vmatpush.msra.mxu0 0.0
        %575 = vmatpush.msra.mxu0 0.0
        %576 = vmatpush.msra.mxu0 0.0
        %577 = vmatpush.msra.mxu0 0.0
        %578 = vmatpush.msra.mxu0 0.0
        %579 = vmatpush.msra.mxu0 0.0
        %580 = vmatpush.msra.mxu0 0.0
        %581 = vmatpush.msra.mxu0 0.0
        %582 = vmatpush.msra.mxu0 %v569
        %583 = vmatpush.msra.mxu0 %v568
        %584 = vmatpush.msra.mxu0 %v567
        %585 = vmatpush.msra.mxu0 %v566
        %586 = vmatmul.f32.gmra.mxu0 %v314
        %v587 = vpop.f32.mrf.mxu0
        %v588 = vadd.f32 0.0, %v587
        %589 = vmatmul.f32.gmra.mxu0 %v317
        %v590 = vpop.f32.mrf.mxu0
        %v591 = vadd.f32 0.0, %v590
        %592 = vmatmul.f32.gmra.mxu0 %v320
        %v593 = vpop.f32.mrf.mxu0
        %v594 = vadd.f32 0.0, %v593
        %595 = vmatmul.f32.gmra.mxu0 %v323
        %v596 = vpop.f32.mrf.mxu0
        %v597 = vadd.f32 0.0, %v596
        %598 = vdwg.mxu0
        %599 = vmatpush.msra.mxu0 %v304
        %600 = vmatpush.msra.mxu0 %v303
        %601 = vmatpush.msra.mxu0 %v302
        %602 = vmatpush.msra.mxu0 %v301
        %603 = vmatpush.msra.mxu0 %v300
        %604 = vmatpush.msra.mxu0 %v299
        %605 = vmatpush.msra.mxu0 %v298
        %606 = vmatpush.msra.mxu0 %v297
        %607 = vmatpush.msra.mxu0 %v296
        %608 = vmatpush.msra.mxu0 %v295
        %609 = vmatpush.msra.mxu0 %v294
        %610 = vmatpush.msra.mxu0 %v293
        %611 = vmatpush.msra.mxu0 %v292
        %612 = vmatpush.msra.mxu0 %v291
        %613 = vmatpush.msra.mxu0 %v290
        %614 = vmatpush.msra.mxu0 %v289
        %615 = vmatmul.f32.gmra.mxu0 %v588
        %v616 = vpop.f32.mrf.mxu0
        %v617 = vadd.f32 0.0, %v616
        %618 = vmatmul.f32.gmra.mxu0 %v591
        %v619 = vpop.f32.mrf.mxu0
        %v620 = vadd.f32 0.0, %v619
        %621 = vmatmul.f32.gmra.mxu0 %v594
        %v622 = vpop.f32.mrf.mxu0
        %v623 = vadd.f32 0.0, %v622
        %624 = vmatmul.f32.gmra.mxu0 %v597
        %v625 = vpop.f32.mrf.mxu0
        %v626 = vadd.f32 0.0, %v625
        %627 = vdwg.mxu0
        %v629 = vsel %vm383, %v617, 0
        %v632 = vsel %vm383, %v620, 0
        %v635 = vsel %vm383, %v623, 0
        %v638 = vsel %vm383, %v626, 0
        %640 = vmatpush.msra.mxu0 0.0
        %641 = vmatpush.msra.mxu0 0.0
        %642 = vmatpush.msra.mxu0 0.0
        %643 = vmatpush.msra.mxu0 0.0
        %644 = vmatpush.msra.mxu0 0.0
        %645 = vmatpush.msra.mxu0 0.0
        %646 = vmatpush.msra.mxu0 0.0
        %647 = vmatpush.msra.mxu0 0.0
        %648 = vmatpush.msra.mxu0 0.0
        %649 = vmatpush.msra.mxu0 0.0
        %650 = vmatpush.msra.mxu0 0.0
        %651 = vmatpush.msra.mxu0 0.0
        %652 = vmatpush.msra.mxu0 0.0
        %653 = vmatpush.msra.mxu0 0.0
        %654 = vmatpush.msra.mxu0 0.0
        %655 = vmatpush.msra.mxu0 %v398
        %656 = vmatmul.f32.gmra.mxu0 %v629
        %v657 = vpop.f32.mrf.mxu0
        %v658 = vadd.f32 0.0, %v657
        %659 = vmatmul.f32.gmra.mxu0 %v632
        %v660 = vpop.f32.mrf.mxu0
        %v661 = vadd.f32 0.0, %v660
        %662 = vmatmul.f32.gmra.mxu0 %v635
        %v663 = vpop.f32.mrf.mxu0
        %v664 = vadd.f32 0.0, %v663
        %665 = vmatmul.f32.gmra.mxu0 %v638
        %v666 = vpop.f32.mrf.mxu0
        %v667 = vadd.f32 0.0, %v666
        %668 = vdwg.mxu0
        %v669 = vsub.f32 %v588, %v658
        %v670 = vsub.f32 %v591, %v661
        %v671 = vsub.f32 %v594, %v664
        %v672 = vsub.f32 %v597, %v667
        %v673 = vmul.f32 %v669, %v669
        %v674 = vmul.f32 %v670, %v670
        %v675 = vmul.f32 %v671, %v671
        %v676 = vmul.f32 %v672, %v672
        %677 = vmatpush.msra.mxu0 %v304
        %678 = vmatpush.msra.mxu0 %v303
        %679 = vmatpush.msra.mxu0 %v302
        %680 = vmatpush.msra.mxu0 %v301
        %681 = vmatpush.msra.mxu0 %v300
        %682 = vmatpush.msra.mxu0 %v299
        %683 = vmatpush.msra.mxu0 %v298
        %684 = vmatpush.msra.mxu0 %v297
        %685 = vmatpush.msra.mxu0 %v296
        %686 = vmatpush.msra.mxu0 %v295
        %687 = vmatpush.msra.mxu0 %v294
        %688 = vmatpush.msra.mxu0 %v293
        %689 = vmatpush.msra.mxu0 %v292
        %690 = vmatpush.msra.mxu0 %v291
        %691 = vmatpush.msra.mxu0 %v290
        %692 = vmatpush.msra.mxu0 %v289
        %693 = vmatmul.f32.gmra.mxu0 %v673
        %v694 = vpop.f32.mrf.mxu0
        %v695 = vadd.f32 1e-05, %v694
        %696 = vmatmul.f32.gmra.mxu0 %v674
        %v697 = vpop.f32.mrf.mxu0
        %v698 = vadd.f32 1e-05, %v697
        %699 = vmatmul.f32.gmra.mxu0 %v675
        %v700 = vpop.f32.mrf.mxu0
        %v701 = vadd.f32 1e-05, %v700
        %702 = vmatmul.f32.gmra.mxu0 %v676
        %v703 = vpop.f32.mrf.mxu0
        %v704 = vadd.f32 1e-05, %v703
        %705 = vdwg.mxu0
        %v706 = vrsqrt.pop %v695
        %v707 = vmul.f32 %v706, %v695
        %v708 = vmul.f32 %v707, %v706
        %v709 = vmul.f32 0.5, %v708
        %v710 = vsub.f32 1.5, %v709
        %v711 = vmul.f32 %v706, %v710
        %vm712 = vweird.f32 %v695
        %vm713 = vweird.f32 %v706
        %vm714 = vmor %vm712, %vm713
        %v715 = vsel %vm714, %v706, %v711
        %v716 = vrsqrt.pop %v698
        %v717 = vmul.f32 %v716, %v698
        %v718 = vmul.f32 %v717, %v716
        %v719 = vmul.f32 0.5, %v718
        %v720 = vsub.f32 1.5, %v719
        %v721 = vmul.f32 %v716, %v720
        %vm722 = vweird.f32 %v698
        %vm723 = vweird.f32 %v716
        %vm724 = vmor %vm722, %vm723
        %v725 = vsel %vm724, %v716, %v721
        %v726 = vrsqrt.pop %v701
        %v727 = vmul.f32 %v726, %v701
        %v728 = vmul.f32 %v727, %v726
        %v729 = vmul.f32 0.5, %v728
        %v730 = vsub.f32 1.5, %v729
        %v731 = vmul.f32 %v726, %v730
        %vm732 = vweird.f32 %v701
        %vm733 = vweird.f32 %v726
        %vm734 = vmor %vm732, %vm733
        %v735 = vsel %vm734, %v726, %v731
        %v736 = vrsqrt.pop %v704
        %v737 = vmul.f32 %v736, %v704
        %v738 = vmul.f32 %v737, %v736
        %v739 = vmul.f32 0.5, %v738
        %v740 = vsub.f32 1.5, %v739
        %v741 = vmul.f32 %v736, %v740
        %vm742 = vweird.f32 %v704
        %vm743 = vweird.f32 %v736
        %vm744 = vmor %vm742, %vm743
        %v745 = vsel %vm744, %v736, %v741
        %v747 = vsel %vm383, %v715, 0
        %v750 = vsel %vm383, %v725, 0
        %v753 = vsel %vm383, %v735, 0
        %v756 = vsel %vm383, %v745, 0
        %758 = vmatpush.msra.mxu0 0.0
        %759 = vmatpush.msra.mxu0 0.0
        %760 = vmatpush.msra.mxu0 0.0
        %761 = vmatpush.msra.mxu0 0.0
        %762 = vmatpush.msra.mxu0 0.0
        %763 = vmatpush.msra.mxu0 0.0
        %764 = vmatpush.msra.mxu0 0.0
        %765 = vmatpush.msra.mxu0 0.0
        %766 = vmatpush.msra.mxu0 0.0
        %767 = vmatpush.msra.mxu0 0.0
        %768 = vmatpush.msra.mxu0 0.0
        %769 = vmatpush.msra.mxu0 0.0
        %770 = vmatpush.msra.mxu0 0.0
        %771 = vmatpush.msra.mxu0 0.0
        %772 = vmatpush.msra.mxu0 0.0
        %773 = vmatpush.msra.mxu0 %v519
        %774 = vmatmul.f32.gmra.mxu0 %v747
        %v775 = vpop.f32.mrf.mxu0
        %v776 = vadd.f32 0.0, %v775
        %777 = vmatmul.f32.gmra.mxu0 %v750
        %v778 = vpop.f32.mrf.mxu0
        %v779 = vadd.f32 0.0, %v778
        %780 = vmatmul.f32.gmra.mxu0 %v753
        %v781 = vpop.f32.mrf.mxu0
        %v782 = vadd.f32 0.0, %v781
        %783 = vmatmul.f32.gmra.mxu0 %v756
        %v784 = vpop.f32.mrf.mxu0
        %v785 = vadd.f32 0.0, %v784
        %786 = vdwg.mxu0
        %v787 = vmul.f32 %v669, %v776
        %v788 = vmul.f32 %v670, %v779
        %v789 = vmul.f32 %v671, %v782
        %v790 = vmul.f32 %v672, %v785
        %v791 = vadd.f32 %v787, %v555
        %v792 = vadd.f32 %v788, %v555
        %v793 = vadd.f32 %v789, %v555
        %v794 = vadd.f32 %v790, %v555
        %s795 = scalar_lea.vmem %s277, 8 [#allocation7]
        %796 = vst [vmem:[%s795] sm:$0xff] %v791
        %797 = vst [vmem:[%s795 + $0x20] sm:$0xff] %v792
        %798 = vst [vmem:[%s795 + $0x40] sm:$0xff] %v793
        %799 = vst [vmem:[%s795 + $0x60] sm:$0xff] %v794
        %s800 = scalar_lea.vmem [#allocation2], 64
        %v801 = vld [vmem:[%s800] sm:$0xff]
        %v802 = vld [vmem:[%s800 + $0x8] sm:$0xff]
        %v803 = vld [vmem:[%s800 + $0x10] sm:$0xff]
        %v804 = vld [vmem:[%s800 + $0x18] sm:$0xff]
        %805 = vmatpush.msra.mxu0 0.0
        %806 = vmatpush.msra.mxu0 0.0
        %807 = vmatpush.msra.mxu0 0.0
        %808 = vmatpush.msra.mxu0 0.0
        %809 = vmatpush.msra.mxu0 0.0
        %810 = vmatpush.msra.mxu0 0.0
        %811 = vmatpush.msra.mxu0 0.0
        %812 = vmatpush.msra.mxu0 0.0
        %813 = vmatpush.msra.mxu0 0.0
        %814 = vmatpush.msra.mxu0 0.0
        %815 = vmatpush.msra.mxu0 0.0
        %816 = vmatpush.msra.mxu0 0.0
        %817 = vmatpush.msra.mxu0 %v804
        %818 = vmatpush.msra.mxu0 %v803
        %819 = vmatpush.msra.mxu0 %v802
        %820 = vmatpush.msra.mxu0 %v801
        %821 = vmatmul.f32.gmra.mxu0 %v314
        %v822 = vpop.f32.mrf.mxu0
        %v823 = vadd.f32 0.0, %v822
        %824 = vmatmul.f32.gmra.mxu0 %v317
        %v825 = vpop.f32.mrf.mxu0
        %v826 = vadd.f32 0.0, %v825
        %827 = vmatmul.f32.gmra.mxu0 %v320
        %v828 = vpop.f32.mrf.mxu0
        %v829 = vadd.f32 0.0, %v828
        %830 = vmatmul.f32.gmra.mxu0 %v323
        %v831 = vpop.f32.mrf.mxu0
        %v832 = vadd.f32 0.0, %v831
        %833 = vdwg.mxu0
        %834 = vmatpush.msra.mxu0 %v304
        %835 = vmatpush.msra.mxu0 %v303
        %836 = vmatpush.msra.mxu0 %v302
        %837 = vmatpush.msra.mxu0 %v301
        %838 = vmatpush.msra.mxu0 %v300
        %839 = vmatpush.msra.mxu0 %v299
        %840 = vmatpush.msra.mxu0 %v298
        %841 = vmatpush.msra.mxu0 %v297
        %842 = vmatpush.msra.mxu0 %v296
        %843 = vmatpush.msra.mxu0 %v295
        %844 = vmatpush.msra.mxu0 %v294
        %845 = vmatpush.msra.mxu0 %v293
        %846 = vmatpush.msra.mxu0 %v292
        %847 = vmatpush.msra.mxu0 %v291
        %848 = vmatpush.msra.mxu0 %v290
        %849 = vmatpush.msra.mxu0 %v289
        %850 = vmatmul.f32.gmra.mxu0 %v823
        %v851 = vpop.f32.mrf.mxu0
        %v852 = vadd.f32 0.0, %v851
        %853 = vmatmul.f32.gmra.mxu0 %v826
        %v854 = vpop.f32.mrf.mxu0
        %v855 = vadd.f32 0.0, %v854
        %856 = vmatmul.f32.gmra.mxu0 %v829
        %v857 = vpop.f32.mrf.mxu0
        %v858 = vadd.f32 0.0, %v857
        %859 = vmatmul.f32.gmra.mxu0 %v832
        %v860 = vpop.f32.mrf.mxu0
        %v861 = vadd.f32 0.0, %v860
        %862 = vdwg.mxu0
        %v864 = vsel %vm383, %v852, 0
        %v867 = vsel %vm383, %v855, 0
        %v870 = vsel %vm383, %v858, 0
        %v873 = vsel %vm383, %v861, 0
        %875 = vmatpush.msra.mxu0 0.0
        %876 = vmatpush.msra.mxu0 0.0
        %877 = vmatpush.msra.mxu0 0.0
        %878 = vmatpush.msra.mxu0 0.0
        %879 = vmatpush.msra.mxu0 0.0
        %880 = vmatpush.msra.mxu0 0.0
        %881 = vmatpush.msra.mxu0 0.0
        %882 = vmatpush.msra.mxu0 0.0
        %883 = vmatpush.msra.mxu0 0.0
        %884 = vmatpush.msra.mxu0 0.0
        %885 = vmatpush.msra.mxu0 0.0
        %886 = vmatpush.msra.mxu0 0.0
        %887 = vmatpush.msra.mxu0 0.0
        %888 = vmatpush.msra.mxu0 0.0
        %889 = vmatpush.msra.mxu0 0.0
        %890 = vmatpush.msra.mxu0 %v398
        %891 = vmatmul.f32.gmra.mxu0 %v864
        %v892 = vpop.f32.mrf.mxu0
        %v893 = vadd.f32 0.0, %v892
        %894 = vmatmul.f32.gmra.mxu0 %v867
        %v895 = vpop.f32.mrf.mxu0
        %v896 = vadd.f32 0.0, %v895
        %897 = vmatmul.f32.gmra.mxu0 %v870
        %v898 = vpop.f32.mrf.mxu0
        %v899 = vadd.f32 0.0, %v898
        %900 = vmatmul.f32.gmra.mxu0 %v873
        %v901 = vpop.f32.mrf.mxu0
        %v902 = vadd.f32 0.0, %v901
        %903 = vdwg.mxu0
        %v904 = vsub.f32 %v823, %v893
        %v905 = vsub.f32 %v826, %v896
        %v906 = vsub.f32 %v829, %v899
        %v907 = vsub.f32 %v832, %v902
        %v908 = vmul.f32 %v904, %v904
        %v909 = vmul.f32 %v905, %v905
        %v910 = vmul.f32 %v906, %v906
        %v911 = vmul.f32 %v907, %v907
        %912 = vmatpush.msra.mxu0 %v304
        %913 = vmatpush.msra.mxu0 %v303
        %914 = vmatpush.msra.mxu0 %v302
        %915 = vmatpush.msra.mxu0 %v301
        %916 = vmatpush.msra.mxu0 %v300
        %917 = vmatpush.msra.mxu0 %v299
        %918 = vmatpush.msra.mxu0 %v298
        %919 = vmatpush.msra.mxu0 %v297
        %920 = vmatpush.msra.mxu0 %v296
        %921 = vmatpush.msra.mxu0 %v295
        %922 = vmatpush.msra.mxu0 %v294
        %923 = vmatpush.msra.mxu0 %v293
        %924 = vmatpush.msra.mxu0 %v292
        %925 = vmatpush.msra.mxu0 %v291
        %926 = vmatpush.msra.mxu0 %v290
        %927 = vmatpush.msra.mxu0 %v289
        %928 = vmatmul.f32.gmra.mxu0 %v908
        %v929 = vpop.f32.mrf.mxu0
        %v930 = vadd.f32 1e-05, %v929
        %931 = vmatmul.f32.gmra.mxu0 %v909
        %v932 = vpop.f32.mrf.mxu0
        %v933 = vadd.f32 1e-05, %v932
        %934 = vmatmul.f32.gmra.mxu0 %v910
        %v935 = vpop.f32.mrf.mxu0
        %v936 = vadd.f32 1e-05, %v935
        %937 = vmatmul.f32.gmra.mxu0 %v911
        %v938 = vpop.f32.mrf.mxu0
        %v939 = vadd.f32 1e-05, %v938
        %940 = vdwg.mxu0
        %v941 = vrsqrt.pop %v930
        %v942 = vmul.f32 %v941, %v930
        %v943 = vmul.f32 %v942, %v941
        %v944 = vmul.f32 0.5, %v943
        %v945 = vsub.f32 1.5, %v944
        %v946 = vmul.f32 %v941, %v945
        %vm947 = vweird.f32 %v930
        %vm948 = vweird.f32 %v941
        %vm949 = vmor %vm947, %vm948
        %v950 = vsel %vm949, %v941, %v946
        %v951 = vrsqrt.pop %v933
        %v952 = vmul.f32 %v951, %v933
        %v953 = vmul.f32 %v952, %v951
        %v954 = vmul.f32 0.5, %v953
        %v955 = vsub.f32 1.5, %v954
        %v956 = vmul.f32 %v951, %v955
        %vm957 = vweird.f32 %v933
        %vm958 = vweird.f32 %v951
        %vm959 = vmor %vm957, %vm958
        %v960 = vsel %vm959, %v951, %v956
        %v961 = vrsqrt.pop %v936
        %v962 = vmul.f32 %v961, %v936
        %v963 = vmul.f32 %v962, %v961
        %v964 = vmul.f32 0.5, %v963
        %v965 = vsub.f32 1.5, %v964
        %v966 = vmul.f32 %v961, %v965
        %vm967 = vweird.f32 %v936
        %vm968 = vweird.f32 %v961
        %vm969 = vmor %vm967, %vm968
        %v970 = vsel %vm969, %v961, %v966
        %v971 = vrsqrt.pop %v939
        %v972 = vmul.f32 %v971, %v939
        %v973 = vmul.f32 %v972, %v971
        %v974 = vmul.f32 0.5, %v973
        %v975 = vsub.f32 1.5, %v974
        %v976 = vmul.f32 %v971, %v975
        %vm977 = vweird.f32 %v939
        %vm978 = vweird.f32 %v971
        %vm979 = vmor %vm977, %vm978
        %v980 = vsel %vm979, %v971, %v976
        %v982 = vsel %vm383, %v950, 0
        %v985 = vsel %vm383, %v960, 0
        %v988 = vsel %vm383, %v970, 0
        %v991 = vsel %vm383, %v980, 0
        %993 = vmatpush.msra.mxu0 0.0
        %994 = vmatpush.msra.mxu0 0.0
        %995 = vmatpush.msra.mxu0 0.0
        %996 = vmatpush.msra.mxu0 0.0
        %997 = vmatpush.msra.mxu0 0.0
        %998 = vmatpush.msra.mxu0 0.0
        %999 = vmatpush.msra.mxu0 0.0
        %1000 = vmatpush.msra.mxu0 0.0
        %1001 = vmatpush.msra.mxu0 0.0
        %1002 = vmatpush.msra.mxu0 0.0
        %1003 = vmatpush.msra.mxu0 0.0
        %1004 = vmatpush.msra.mxu0 0.0
        %1005 = vmatpush.msra.mxu0 0.0
        %1006 = vmatpush.msra.mxu0 0.0
        %1007 = vmatpush.msra.mxu0 0.0
        %1008 = vmatpush.msra.mxu0 %v519
        %1009 = vmatmul.f32.gmra.mxu0 %v982
        %v1010 = vpop.f32.mrf.mxu0
        %v1011 = vadd.f32 0.0, %v1010
        %1012 = vmatmul.f32.gmra.mxu0 %v985
        %v1013 = vpop.f32.mrf.mxu0
        %v1014 = vadd.f32 0.0, %v1013
        %1015 = vmatmul.f32.gmra.mxu0 %v988
        %v1016 = vpop.f32.mrf.mxu0
        %v1017 = vadd.f32 0.0, %v1016
        %1018 = vmatmul.f32.gmra.mxu0 %v991
        %v1019 = vpop.f32.mrf.mxu0
        %v1020 = vadd.f32 0.0, %v1019
        %1021 = vdwg.mxu0
        %v1022 = vmul.f32 %v904, %v1011
        %v1023 = vmul.f32 %v905, %v1014
        %v1024 = vmul.f32 %v906, %v1017
        %v1025 = vmul.f32 %v907, %v1020
        %v1026 = vadd.f32 %v1022, %v555
        %v1027 = vadd.f32 %v1023, %v555
        %v1028 = vadd.f32 %v1024, %v555
        %v1029 = vadd.f32 %v1025, %v555
        %s1030 = scalar_lea.vmem %s277, 16 [#allocation7]
        %1031 = vst [vmem:[%s1030] sm:$0xff] %v1026
        %1032 = vst [vmem:[%s1030 + $0x20] sm:$0xff] %v1027
        %1033 = vst [vmem:[%s1030 + $0x40] sm:$0xff] %v1028
        %1034 = vst [vmem:[%s1030 + $0x60] sm:$0xff] %v1029
        %s1035 = scalar_lea.vmem [#allocation2], 96
        %v1036 = vld [vmem:[%s1035] sm:$0xff]
        %v1037 = vld [vmem:[%s1035 + $0x8] sm:$0xff]
        %v1038 = vld [vmem:[%s1035 + $0x10] sm:$0xff]
        %v1039 = vld [vmem:[%s1035 + $0x18] sm:$0xff]
        %1040 = vmatpush.msra.mxu0 0.0
        %1041 = vmatpush.msra.mxu0 0.0
        %1042 = vmatpush.msra.mxu0 0.0
        %1043 = vmatpush.msra.mxu0 0.0
        %1044 = vmatpush.msra.mxu0 0.0
        %1045 = vmatpush.msra.mxu0 0.0
        %1046 = vmatpush.msra.mxu0 0.0
        %1047 = vmatpush.msra.mxu0 0.0
        %1048 = vmatpush.msra.mxu0 0.0
        %1049 = vmatpush.msra.mxu0 0.0
        %1050 = vmatpush.msra.mxu0 0.0
        %1051 = vmatpush.msra.mxu0 0.0
        %1052 = vmatpush.msra.mxu0 %v1039
        %1053 = vmatpush.msra.mxu0 %v1038
        %1054 = vmatpush.msra.mxu0 %v1037
        %1055 = vmatpush.msra.mxu0 %v1036
        %1056 = vmatmul.f32.gmra.mxu0 %v314
        %v1057 = vpop.f32.mrf.mxu0
        %v1058 = vadd.f32 0.0, %v1057
        %1059 = vmatmul.f32.gmra.mxu0 %v317
        %v1060 = vpop.f32.mrf.mxu0
        %v1061 = vadd.f32 0.0, %v1060
        %1062 = vmatmul.f32.gmra.mxu0 %v320
        %v1063 = vpop.f32.mrf.mxu0
        %v1064 = vadd.f32 0.0, %v1063
        %1065 = vmatmul.f32.gmra.mxu0 %v323
        %v1066 = vpop.f32.mrf.mxu0
        %v1067 = vadd.f32 0.0, %v1066
        %1068 = vdwg.mxu0
        %1069 = vmatpush.msra.mxu0 %v304
        %1070 = vmatpush.msra.mxu0 %v303
        %1071 = vmatpush.msra.mxu0 %v302
        %1072 = vmatpush.msra.mxu0 %v301
        %1073 = vmatpush.msra.mxu0 %v300
        %1074 = vmatpush.msra.mxu0 %v299
        %1075 = vmatpush.msra.mxu0 %v298
        %1076 = vmatpush.msra.mxu0 %v297
        %1077 = vmatpush.msra.mxu0 %v296
        %1078 = vmatpush.msra.mxu0 %v295
        %1079 = vmatpush.msra.mxu0 %v294
        %1080 = vmatpush.msra.mxu0 %v293
        %1081 = vmatpush.msra.mxu0 %v292
        %1082 = vmatpush.msra.mxu0 %v291
        %1083 = vmatpush.msra.mxu0 %v290
        %1084 = vmatpush.msra.mxu0 %v289
        %1085 = vmatmul.f32.gmra.mxu0 %v1058
        %v1086 = vpop.f32.mrf.mxu0
        %v1087 = vadd.f32 0.0, %v1086
        %1088 = vmatmul.f32.gmra.mxu0 %v1061
        %v1089 = vpop.f32.mrf.mxu0
        %v1090 = vadd.f32 0.0, %v1089
        %1091 = vmatmul.f32.gmra.mxu0 %v1064
        %v1092 = vpop.f32.mrf.mxu0
        %v1093 = vadd.f32 0.0, %v1092
        %1094 = vmatmul.f32.gmra.mxu0 %v1067
        %v1095 = vpop.f32.mrf.mxu0
        %v1096 = vadd.f32 0.0, %v1095
        %1097 = vdwg.mxu0
        %v1099 = vsel %vm383, %v1087, 0
        %v1102 = vsel %vm383, %v1090, 0
        %v1105 = vsel %vm383, %v1093, 0
        %v1108 = vsel %vm383, %v1096, 0
        %1110 = vmatpush.msra.mxu0 0.0
        %1111 = vmatpush.msra.mxu0 0.0
        %1112 = vmatpush.msra.mxu0 0.0
        %1113 = vmatpush.msra.mxu0 0.0
        %1114 = vmatpush.msra.mxu0 0.0
        %1115 = vmatpush.msra.mxu0 0.0
        %1116 = vmatpush.msra.mxu0 0.0
        %1117 = vmatpush.msra.mxu0 0.0
        %1118 = vmatpush.msra.mxu0 0.0
        %1119 = vmatpush.msra.mxu0 0.0
        %1120 = vmatpush.msra.mxu0 0.0
        %1121 = vmatpush.msra.mxu0 0.0
        %1122 = vmatpush.msra.mxu0 0.0
        %1123 = vmatpush.msra.mxu0 0.0
        %1124 = vmatpush.msra.mxu0 0.0
        %1125 = vmatpush.msra.mxu0 %v398
        %1126 = vmatmul.f32.gmra.mxu0 %v1099
        %v1127 = vpop.f32.mrf.mxu0
        %v1128 = vadd.f32 0.0, %v1127
        %1129 = vmatmul.f32.gmra.mxu0 %v1102
        %v1130 = vpop.f32.mrf.mxu0
        %v1131 = vadd.f32 0.0, %v1130
        %1132 = vmatmul.f32.gmra.mxu0 %v1105
        %v1133 = vpop.f32.mrf.mxu0
        %v1134 = vadd.f32 0.0, %v1133
        %1135 = vmatmul.f32.gmra.mxu0 %v1108
        %v1136 = vpop.f32.mrf.mxu0
        %v1137 = vadd.f32 0.0, %v1136
        %1138 = vdwg.mxu0
        %v1139 = vsub.f32 %v1058, %v1128
        %v1140 = vsub.f32 %v1061, %v1131
        %v1141 = vsub.f32 %v1064, %v1134
        %v1142 = vsub.f32 %v1067, %v1137
        %v1143 = vmul.f32 %v1139, %v1139
        %v1144 = vmul.f32 %v1140, %v1140
        %v1145 = vmul.f32 %v1141, %v1141
        %v1146 = vmul.f32 %v1142, %v1142
        %1147 = vmatpush.msra.mxu0 %v304
        %1148 = vmatpush.msra.mxu0 %v303
        %1149 = vmatpush.msra.mxu0 %v302
        %1150 = vmatpush.msra.mxu0 %v301
        %1151 = vmatpush.msra.mxu0 %v300
        %1152 = vmatpush.msra.mxu0 %v299
        %1153 = vmatpush.msra.mxu0 %v298
        %1154 = vmatpush.msra.mxu0 %v297
        %1155 = vmatpush.msra.mxu0 %v296
        %1156 = vmatpush.msra.mxu0 %v295
        %1157 = vmatpush.msra.mxu0 %v294
        %1158 = vmatpush.msra.mxu0 %v293
        %1159 = vmatpush.msra.mxu0 %v292
        %1160 = vmatpush.msra.mxu0 %v291
        %1161 = vmatpush.msra.mxu0 %v290
        %1162 = vmatpush.msra.mxu0 %v289
        %1163 = vmatmul.f32.gmra.mxu0 %v1143
        %v1164 = vpop.f32.mrf.mxu0
        %v1165 = vadd.f32 1e-05, %v1164
        %1166 = vmatmul.f32.gmra.mxu0 %v1144
        %v1167 = vpop.f32.mrf.mxu0
        %v1168 = vadd.f32 1e-05, %v1167
        %1169 = vmatmul.f32.gmra.mxu0 %v1145
        %v1170 = vpop.f32.mrf.mxu0
        %v1171 = vadd.f32 1e-05, %v1170
        %1172 = vmatmul.f32.gmra.mxu0 %v1146
        %v1173 = vpop.f32.mrf.mxu0
        %v1174 = vadd.f32 1e-05, %v1173
        %1175 = vdwg.mxu0
        %v1176 = vrsqrt.pop %v1165
        %v1177 = vmul.f32 %v1176, %v1165
        %v1178 = vmul.f32 %v1177, %v1176
        %v1179 = vmul.f32 0.5, %v1178
        %v1180 = vsub.f32 1.5, %v1179
        %v1181 = vmul.f32 %v1176, %v1180
        %vm1182 = vweird.f32 %v1165
        %vm1183 = vweird.f32 %v1176
        %vm1184 = vmor %vm1182, %vm1183
        %v1185 = vsel %vm1184, %v1176, %v1181
        %v1186 = vrsqrt.pop %v1168
        %v1187 = vmul.f32 %v1186, %v1168
        %v1188 = vmul.f32 %v1187, %v1186
        %v1189 = vmul.f32 0.5, %v1188
        %v1190 = vsub.f32 1.5, %v1189
        %v1191 = vmul.f32 %v1186, %v1190
        %vm1192 = vweird.f32 %v1168
        %vm1193 = vweird.f32 %v1186
        %vm1194 = vmor %vm1192, %vm1193
        %v1195 = vsel %vm1194, %v1186, %v1191
        %v1196 = vrsqrt.pop %v1171
        %v1197 = vmul.f32 %v1196, %v1171
        %v1198 = vmul.f32 %v1197, %v1196
        %v1199 = vmul.f32 0.5, %v1198
        %v1200 = vsub.f32 1.5, %v1199
        %v1201 = vmul.f32 %v1196, %v1200
        %vm1202 = vweird.f32 %v1171
        %vm1203 = vweird.f32 %v1196
        %vm1204 = vmor %vm1202, %vm1203
        %v1205 = vsel %vm1204, %v1196, %v1201
        %v1206 = vrsqrt.pop %v1174
        %v1207 = vmul.f32 %v1206, %v1174
        %v1208 = vmul.f32 %v1207, %v1206
        %v1209 = vmul.f32 0.5, %v1208
        %v1210 = vsub.f32 1.5, %v1209
        %v1211 = vmul.f32 %v1206, %v1210
        %vm1212 = vweird.f32 %v1174
        %vm1213 = vweird.f32 %v1206
        %vm1214 = vmor %vm1212, %vm1213
        %v1215 = vsel %vm1214, %v1206, %v1211
        %v1217 = vsel %vm383, %v1185, 0
        %v1220 = vsel %vm383, %v1195, 0
        %v1223 = vsel %vm383, %v1205, 0
        %v1226 = vsel %vm383, %v1215, 0
        %1228 = vmatpush.msra.mxu0 0.0
        %1229 = vmatpush.msra.mxu0 0.0
        %1230 = vmatpush.msra.mxu0 0.0
        %1231 = vmatpush.msra.mxu0 0.0
        %1232 = vmatpush.msra.mxu0 0.0
        %1233 = vmatpush.msra.mxu0 0.0
        %1234 = vmatpush.msra.mxu0 0.0
        %1235 = vmatpush.msra.mxu0 0.0
        %1236 = vmatpush.msra.mxu0 0.0
        %1237 = vmatpush.msra.mxu0 0.0
        %1238 = vmatpush.msra.mxu0 0.0
        %1239 = vmatpush.msra.mxu0 0.0
        %1240 = vmatpush.msra.mxu0 0.0
        %1241 = vmatpush.msra.mxu0 0.0
        %1242 = vmatpush.msra.mxu0 0.0
        %1243 = vmatpush.msra.mxu0 %v519
        %1244 = vmatmul.f32.gmra.mxu0 %v1217
        %v1245 = vpop.f32.mrf.mxu0
        %v1246 = vadd.f32 0.0, %v1245
        %1247 = vmatmul.f32.gmra.mxu0 %v1220
        %v1248 = vpop.f32.mrf.mxu0
        %v1249 = vadd.f32 0.0, %v1248
        %1250 = vmatmul.f32.gmra.mxu0 %v1223
        %v1251 = vpop.f32.mrf.mxu0
        %v1252 = vadd.f32 0.0, %v1251
        %1253 = vmatmul.f32.gmra.mxu0 %v1226
        %v1254 = vpop.f32.mrf.mxu0
        %v1255 = vadd.f32 0.0, %v1254
        %1256 = vdwg.mxu0
        %v1257 = vmul.f32 %v1139, %v1246
        %v1258 = vmul.f32 %v1140, %v1249
        %v1259 = vmul.f32 %v1141, %v1252
        %v1260 = vmul.f32 %v1142, %v1255
        %v1261 = vadd.f32 %v1257, %v555
        %v1262 = vadd.f32 %v1258, %v555
        %v1263 = vadd.f32 %v1259, %v555
        %v1264 = vadd.f32 %v1260, %v555
        %s1265 = scalar_lea.vmem %s277, 24 [#allocation7]
        %1266 = vst [vmem:[%s1265] sm:$0xff] %v1261
        %1267 = vst [vmem:[%s1265 + $0x20] sm:$0xff] %v1262
        %1268 = vst [vmem:[%s1265 + $0x40] sm:$0xff] %v1263
        %1269 = vst [vmem:[%s1265 + $0x60] sm:$0xff] %v1264
        %s1270 = sand.u32 %s161, 1
        %s1271 = scalar_lea.sflag [#allocation4], %s1270
        %s1272 = sand.u32 %s161, 1
        %s1273 = smul.addr %s1272, 128
        %s1274 = scalar_lea.vmem [#allocation7], %s1273
        // Predicated region
        $region53: #{tpu_custom_call.1} parent=43 // pred_check
          %p1275 = pneg %p171
        $region54: #{tpu_custom_call.1} parent=43 // pred_check_branch
          %1277 = sbr.rel (%p1275) target = $region56
        $region55: #{tpu_custom_call.1} parent=43 // pred_region
          %s1278 = smul.u32 4, %s22
          %1280 = vsyncadd %s1271, 0
          %s1281 = smul.addr %s1278, 4
          %s1282 = smul.addr %s1281, 8
          %s1283 = scalar_lea.hbm %s6, %s1282
          %s1284 = sshll.u32 %s1274, 4
          %s1285 = int_to_ptr.vmem [resolvable:$true] %s1284
          %s1286 = sshll.u32 %s1283, 4
          %s1287 = int_to_ptr.hbm [resolvable:$true] %s1286
          %1292 = dma.vmem_to_hbm [thread:$0]  %s1285, 2048, %s1287, %s1271, 128, 128, 8
        $region56: #{tpu_custom_call.1} parent=43 // pred_fallthru
          _
      $region44: #{tpu_custom_call.1} parent=5 // pred_fallthru
        _
      %p1293 = scmp.le.s32.totalorder 2, %s17
      // Predicated region
      $region57: #{tpu_custom_call.1} parent=5 // pred_check
        %p1294 = pneg %p1293
      $region58: #{tpu_custom_call.1} parent=5 // pred_check_branch
        %1296 = sbr.rel (%p1294) target = $region60
      $region59: #{tpu_custom_call.1} parent=5 // pred_region
        %s1297 = ssub.s32 %s17, 2
        // Predicated region
        $region61: #{tpu_custom_call.1} parent=59 // pred_check
          %p1298 = pneg %p177
        $region62: #{tpu_custom_call.1} parent=59 // pred_check_branch
          %1300 = sbr.rel (%p1298) target = $region64
        $region63: #{tpu_custom_call.1} parent=59 // pred_region
          %s1301 = sand.u32 %s162, 1
          %s1302 = scalar_lea.sflag [#allocation4], %s1301
          %s1303 = sand.u32 %s162, 1
          %s1304 = smul.addr %s1303, 128
          %s1305 = scalar_lea.vmem [#allocation7], %s1304
          %1307 = dma.done %s1302, 2048
        $region64: #{tpu_custom_call.1} parent=59 // pred_fallthru
          _
      $region60: #{tpu_custom_call.1} parent=5 // pred_fallthru
        _
    $region6: #{tpu_custom_call.1} parent=1 // loop_footer
      %s21 = sadd.s32 1, %s17
    $region7: #{tpu_custom_call.1} parent=1 // loop_footer_branch
      %16 = sbr.rel target = $region3
    $region8: #{tpu_custom_call.1} parent=1 // loop_exit
      _
    %1308 = vsyncpa [#allocation3], 1
    %s1309 = scalar_lea.sflag [#allocation3], 1
    %1310 = vsyncpa %s1309, 1
    %1311 = vsyncpa [#allocation6], 1
    %1312 = vsyncpa [#allocation4], 1
    %s1313 = scalar_lea.sflag [#allocation4], 1
    %1314 = vsyncpa %s1313, 1

</llo_original>
